<compile_context>
chip_gen: v5e
topology: v5e:2x2
jax: 0.10.0
libtpu: 0.0.40
codegen_flags: <defaults>
</compile_context>

<pallas_src>
import functools
import math

import numpy as np
import jax
import jax.numpy as jnp
from jax.experimental import pallas as pl
from jax.experimental.pallas import tpu as pltpu


# ----------------------------------------------------------------------------
# Fused Pallas matmul: out = relu?(x @ w + b), bf16 MXU inputs, f32 accumulation
# ----------------------------------------------------------------------------

_VMEM_BUDGET = 12 << 20      # conservative double-buffered live-set budget (all gens)
_VMEM_LIMIT = 32 << 20       # scoped VMEM requested per pallas_call (<= physical on v7x)


def _pick_tm(m, k, n, out_bytes):
    """Largest M tile whose 2x(x bf16 + w bf16 + out) live set fits, with >=2 steps."""
    tm = 8192
    while tm > 256:
        live = 2 * tm * k * 2 + 2 * k * n * 2 + 2 * tm * n * out_bytes
        if live <= _VMEM_BUDGET and pl.cdiv(m, tm) >= 2:
            break
        tm //= 2
    return tm


def _mm_kernel(x_ref, w_ref, b_ref, o_ref, *, relu):
    acc = jnp.dot(x_ref[...], w_ref[...], preferred_element_type=jnp.float32)
    acc = acc + b_ref[...]
    if relu:
        acc = jnp.maximum(acc, 0.0)
    o_ref[...] = acc.astype(o_ref.dtype)


def pallas_dense(x, w, b, relu, out_dtype=jnp.float32):
    """x:(M,K) @ w:(K,N) + b:(N,) with optional ReLU; full-K blocks, unpadded M/N."""
    M, K = x.shape
    N = w.shape[1]
    out_bytes = jnp.dtype(out_dtype).itemsize
    tm = _pick_tm(M, K, N, out_bytes)
    xb = x.astype(jnp.bfloat16)
    wb = w.astype(jnp.bfloat16)
    bb = b.astype(jnp.float32).reshape(1, N)
    cost = pl.CostEstimate(
        flops=2 * M * K * N, transcendentals=0,
        bytes_accessed=M * K * 2 + K * N * 2 + N * 4 + M * N * out_bytes)
    return pl.pallas_call(
        functools.partial(_mm_kernel, relu=relu),
        out_shape=jax.ShapeDtypeStruct((M, N), out_dtype),
        grid=(pl.cdiv(M, tm),),
        in_specs=[
            pl.BlockSpec((tm, K), lambda i: (i, 0)),   # streamed over M, full K
            pl.BlockSpec((K, N), lambda i: (0, 0)),    # weights resident (const index)
            pl.BlockSpec((1, N), lambda i: (0, 0)),    # BN-folded bias
        ],
        out_specs=pl.BlockSpec((tm, N), lambda i: (i, 0)),
        compiler_params=pltpu.CompilerParams(
            dimension_semantics=("parallel",),          # M axis shards across v7x cores
            vmem_limit_bytes=_VMEM_LIMIT),
        cost_estimate=cost,
    )(xb, wb, bb)


# ----------------------------------------------------------------------------
# Fused cls1 (1x1 conv + BN + ReLU) + AdaptiveAvgPool(1): per-image partial sums
# ----------------------------------------------------------------------------

def _cls1_pool_kernel(x_ref, w_ref, b_ref, o_ref):
    j = pl.program_id(1)
    acc = jnp.dot(x_ref[...], w_ref[...], preferred_element_type=jnp.float32)
    acc = jnp.maximum(acc + b_ref[...], 0.0)
    part = jnp.sum(acc.reshape(-1, 8, acc.shape[-1]), axis=0)   # (8, N) partial sums

    @pl.when(j == 0)
    def _():
        o_ref[0] = part

    @pl.when(j != 0)
    def _():
        o_ref[0] = o_ref[0] + part


@functools.lru_cache(maxsize=None)
def _pick_pool_tm(spatial, cap=8192):
    best, d = 8, 8
    top = min(spatial, cap)
    while d <= top:
        if spatial % d == 0:
            best = d
        d += 8
    return best


def pallas_cls1_pool(x, w, b, n_images, spatial):
    """sum over spatial of relu(x @ w + b) per image; x:(n_images*spatial, K)."""
    M, K = x.shape
    N = w.shape[1]
    assert M == n_images * spatial and spatial % 8 == 0
    tm = _pick_pool_tm(spatial)
    n_sub = spatial // tm
    wb = w.astype(jnp.bfloat16)
    bb = b.astype(jnp.float32).reshape(1, N)
    cost = pl.CostEstimate(
        flops=2 * M * K * N, transcendentals=0,
        bytes_accessed=M * K * 2 + K * N * 2 + N * 4 + n_images * 8 * N * 4)
    out = pl.pallas_call(
        _cls1_pool_kernel,
        out_shape=jax.ShapeDtypeStruct((n_images, 8, N), jnp.float32),
        grid=(n_images, n_sub),
        in_specs=[
            pl.BlockSpec((tm, K), lambda i, j: (i * n_sub + j, 0)),
            pl.BlockSpec((K, N), lambda i, j: (0, 0)),
            pl.BlockSpec((1, N), lambda i, j: (0, 0)),
        ],
        out_specs=pl.BlockSpec((1, 8, N), lambda i, j: (i, 0, 0)),
        compiler_params=pltpu.CompilerParams(
            dimension_semantics=("parallel", "arbitrary"),
            vmem_limit_bytes=_VMEM_LIMIT),
        cost_estimate=cost,
    )(x.astype(jnp.bfloat16), wb, bb)
    return jnp.sum(out, axis=1)        # (n_images, N) pooled SUM (mean finished outside)


def xla_dense(x, w, b, relu):
    y = jnp.dot(x, w, preferred_element_type=jnp.float32) + b
    return jnp.maximum(y, 0.0) if relu else y


# ----------------------------------------------------------------------------
# Conv machinery: im2col + fused matmul, with batching of shared-weight convs
# ----------------------------------------------------------------------------

def _im2col(x, k, pad, dtype):
    """NHWC -> (B*Ho*Wo, k*k*Cin) patches (stride 1) and output spatial meta."""
    B, H, W, Cin = x.shape
    Ho, Wo = H + 2 * pad - k + 1, W + 2 * pad - k + 1
    x = x.astype(dtype)
    if k == 1 and pad == 0:
        return x.reshape(B * H * W, Cin), (B, H, W)
    xp = jnp.pad(x, ((0, 0), (pad, pad), (pad, pad), (0, 0)))
    cols = [xp[:, dh:dh + Ho, dw:dw + Wo, :] for dh in range(k) for dw in range(k)]
    pat = jnp.concatenate(cols, axis=-1)
    # TODO(synk): k>1 convs still materialize the im2col patch tensor in HBM (k*k-fold
    # read inflation); a direct-conv Pallas kernel with a VMEM-resident halo block
    # accumulating over a k*k "arbitrary" tap axis would remove it.
    return pat.reshape(B * Ho * Wo, k * k * Cin), (B, Ho, Wo)


def conv_apply(xs, cp, relu, out_dtype=jnp.bfloat16):
    """Apply one prepared conv (shared weights) to a LIST of NHWC inputs, batched
    along M through a single fused matmul.  Returns a list of NHWC outputs."""
    k, pad = cp["k"], cp["pad"]
    w, b = cp["w"], cp["b"]
    N = w.shape[1]
    m_tot = sum(x.shape[0] * (x.shape[1] + 2 * pad - k + 1) * (x.shape[2] + 2 * pad - k + 1)
                for x in xs)
    # tiny / narrow matmuls stay in XLA (custom-call boundary + overhead dominates)
    use_pallas = (N >= 32) and (m_tot >= 1024)

    pats, metas = [], []
    for x in xs:
        p2, meta = _im2col(x, k, pad, jnp.bfloat16)
        pats.append(p2)
        metas.append(meta)
    xcat = pats[0] if len(pats) == 1 else jnp.concatenate(pats, axis=0)

    if use_pallas:
        y = pallas_dense(xcat, w, b, relu, out_dtype)
    else:
        y = xla_dense(xcat, w.astype(jnp.bfloat16), b, relu).astype(out_dtype)

    outs, off = [], 0
    for (B, Ho, Wo) in metas:
        n = B * Ho * Wo
        outs.append(y[off:off + n].reshape(B, Ho, Wo, N))
        off += n
    return outs


def conv1(x, cp, relu, out_dtype=jnp.bfloat16):
    return conv_apply([x], cp, relu, out_dtype)[0]


def head_apply(xs, hp):
    """Conv3x3+BN+ReLU (+Dropout=identity) + Conv1x1(Cout=1), weights shared by xs."""
    ys = conv_apply(xs, hp["c1"], relu=True)
    return conv_apply(ys, hp["c2"], relu=False, out_dtype=jnp.float32)


def batchnorm_eval(x, bn, eps=1e-5):
    scale = bn["gamma"] / jnp.sqrt(bn["var"] + eps)
    return (x - bn["mean"]) * scale + bn["beta"]


# ----------------------------------------------------------------------------
# Bilinear align_corners resize via two small matmuls (no gathers)
# ----------------------------------------------------------------------------

@functools.lru_cache(maxsize=None)
def _interp_matrix_np(n_in, n_out):
    """(n_out, n_in) bilinear interpolation matrix, align_corners=True."""
    m = np.zeros((n_out, n_in), np.float32)
    if n_out == 1 or n_in == 1:
        m[:, 0] = 1.0
        return m
    src = np.arange(n_out, dtype=np.float64) * (n_in - 1) / (n_out - 1)
    i0 = np.clip(np.floor(src).astype(np.int64), 0, n_in - 1)
    i1 = np.clip(i0 + 1, 0, n_in - 1)
    w = (src - i0).astype(np.float32)
    rows = np.arange(n_out)
    np.add.at(m, (rows, i0), 1.0 - w)
    np.add.at(m, (rows, i1), w)
    return m


def bilinear_resize(x, out_hw):
    """F.interpolate(mode='bilinear', align_corners=True) for NHWC, MXU-friendly."""
    B, H, W, C = x.shape
    Ho, Wo = int(out_hw[0]), int(out_hw[1])
    if (Ho, Wo) == (H, W):
        return x
    ry = jnp.asarray(_interp_matrix_np(H, Ho))     # (Ho, H)
    rx = jnp.asarray(_interp_matrix_np(W, Wo))     # (Wo, W)
    y = jnp.einsum("oh,bhwc->bowc", ry, x)
    y = jnp.einsum("ow,bhwc->bhoc", rx, y)
    return y


def cls_apply(xs, p):
    """cls1 (1x1 conv+BN+ReLU) fused with AdaptiveAvgPool(1), then cls2 MLP."""
    b = xs[0].shape[0]
    sums = []
    for x in xs:
        Bq, H, W, C = x.shape
        spatial = H * W
        if spatial % 8 == 0:
            s = pallas_cls1_pool(x.reshape(Bq * spatial, C),
                                 p["cls1"]["w"], p["cls1"]["b"],
                                 n_images=Bq, spatial=spatial)
        else:  # fallback: unfused conv + mean
            y = conv_apply([x], p["cls1"], relu=True, out_dtype=jnp.float32)[0]
            s = jnp.sum(y, axis=(1, 2))
        sums.append(s / float(spatial))
    pooled = jnp.concatenate(sums, axis=0)                    # (len(xs)*B, 128)
    h = xla_dense(pooled, p["cls2"]["w1"], p["cls2"]["b1"], relu=False)
    o = xla_dense(h, p["cls2"]["w2"], p["cls2"]["b2"], relu=False)
    return [o[i * b:(i + 1) * b] for i in range(len(xs))]


# ----------------------------------------------------------------------------
# Deterministic synthetic parameters, BN folded / transposed ONCE at init
# ----------------------------------------------------------------------------

_KEY = [jax.random.PRNGKey(0)]


def _randn(shape):
    _KEY[0], sub = jax.random.split(_KEY[0])
    return jax.random.normal(sub, shape, dtype=jnp.float32)


def prep_conv(cin, cout, k, pad, *, bias=True, bn=True, eps=1e-5):
    w = _randn((cout, cin, k, k)) * (1.0 / math.sqrt(cin * k * k))
    b = _randn((cout,)) * 0.01 if bias else jnp.zeros((cout,), jnp.float32)
    if bn:
        gamma = 1.0 + 0.1 * _randn((cout,))
        beta = 0.05 * _randn((cout,))
        mean = 0.05 * _randn((cout,))
        var = jnp.ones((cout,), jnp.float32)
        scale = gamma / jnp.sqrt(var + eps)
        w = w * scale[:, None, None, None]
        b = (b - mean) * scale + beta
    # (cout,cin,kh,kw) -> (kh,kw,cin,cout) -> (kh*kw*cin, cout): matches im2col order
    w_mat = jnp.transpose(w, (2, 3, 1, 0)).reshape(k * k * cin, cout)
    return {"w": w_mat, "b": b, "k": k, "pad": pad}


def make_bn(c):
    return {"gamma": 1.0 + 0.1 * _randn((c,)), "beta": 0.05 * _randn((c,)),
            "mean": 0.05 * _randn((c,)), "var": jnp.ones((c,), jnp.float32)}


CONFIG_LIST_EDGE = [[32], [64, 64, 64, 64]]
CONFIG_LIST_MASK = [[32, 0, 32, 3, 1], [64, 0, 64, 3, 1], [64, 0, 64, 5, 2],
                    [64, 0, 64, 5, 2], [64, 0, 64, 7, 3]]


def init_params():
    p = {}
    p["c_mask_conv"] = []
    for cin, _, cout, k, pad in CONFIG_LIST_MASK:
        p["c_mask_conv"].append([prep_conv(c_in, cout, k, pad) for c_in in (cin, cout, cout)])
    # note: s_c_merge is Conv2d(..., kernel=1, stride=1, padding=1) in the reference
    p["s_c_merge"] = [prep_conv(64 * (i + 2), 64, 1, 1)
                      for i in range(1, len(CONFIG_LIST_MASK) - 1)]
    p["c_edge"] = prep_conv(64, 32, 1, 0, bias=False, bn=False)
    p["up_mask"] = {"c1": prep_conv(64, 16, 3, 1), "c2": prep_conv(16, 1, 1, 0, bn=False)}
    p["up_edge"] = {"c1": prep_conv(32, 8, 3, 1), "c2": prep_conv(8, 1, 1, 0, bn=False)}
    p["up_mask_final"] = {"c1": prep_conv(32, 8, 3, 1), "c2": prep_conv(8, 1, 1, 0, bn=False)}
    p["trans_convert"] = prep_conv(768, 64, 1, 0)
    p["trans_up"] = prep_conv(64, 64, 1, 0)
    # only m_e_merge_conv[0] layers [0..3] (Conv, BN, ReLU, Conv) are reached in forward
    p["m_e_conv0"] = prep_conv(32, 32, 3, 1, bn=False)
    p["m_e_bn1"] = make_bn(32)
    p["m_e_conv3"] = prep_conv(32, 32, 3, 1, bn=False)
    p["t_up"] = [prep_conv(32, 32, 7, 3) for _ in range(3)]
    p["cls1"] = prep_conv(32, 128, 1, 0)
    p["cls2"] = {"w1": _randn((128, 64)) * (1.0 / math.sqrt(128)), "b1": _randn((64,)) * 0.01,
                 "w2": _randn((64, 7)) * (1.0 / math.sqrt(64)), "b2": _randn((7,)) * 0.01}
    return p


# ----------------------------------------------------------------------------
# TCSeg forward (faithful to the PyTorch module, eval-mode BN / Dropout)
# ----------------------------------------------------------------------------

def tcseg_forward(p, c_feature, t_feature, x_size):
    edge_out, cls_inputs = [], []

    def cmask(i, x):
        for cp in p["c_mask_conv"][i]:
            x = conv1(x, cp, relu=True)
        return x

    # --- edge branch ---------------------------------------------------------
    feature_0 = cmask(4, c_feature[-1])
    e0 = conv1(feature_0, p["c_edge"], relu=True)
    edge_d_feature = cmask(0, c_feature[0] + bilinear_resize(e0, c_feature[0].shape[1:3]))
    edge_out.append(bilinear_resize(head_apply([edge_d_feature], p["up_edge"])[0], x_size))

    # --- transformer branch --------------------------------------------------
    # t[:,1:].transpose(1,2).reshape(B,C,14,14) keeps tokens row-major == NHWC reshape.
    B, _, C = t_feature.shape
    x_t = t_feature[:, 1:, :].reshape(B, 14, 14, C)
    x_trans = conv1(x_t, p["trans_convert"], relu=True)
    trans_feature = []
    for _ in range(3):
        trans_feature.append(x_trans)
        y = conv1(x_trans, p["trans_up"], relu=True)
        x_trans = bilinear_resize(y, (2 * y.shape[1], 2 * y.shape[2]))

    # --- f_edge loop (single element) ----------------------------------------
    tmp = bilinear_resize(conv1(x_trans, p["c_edge"], relu=True),
                          edge_d_feature.shape[1:3]) + edge_d_feature
    for cp in p["t_up"]:
        tmp = conv1(tmp, cp, relu=True)
    tmp_tr = bilinear_resize(tmp, x_trans.shape[1:3])
    cls_inputs.append(tmp_tr)                                    # -> cls_out[0]

    # --- decoder pyramid ------------------------------------------------------
    f_tmp = [feature_0]
    f_mask = [feature_0]

    s3 = c_feature[3].shape[1:3]
    f_tmp.append(conv1(jnp.concatenate(
        [trans_feature[0], bilinear_resize(f_tmp[0], s3), c_feature[3]], axis=-1),
        p["s_c_merge"][0], relu=True))
    f_mask.append(cmask(3, f_tmp[-1]))

    s2 = c_feature[2].shape[1:3]
    f_tmp.append(conv1(jnp.concatenate(
        [trans_feature[1], bilinear_resize(f_tmp[1], s2),
         bilinear_resize(f_tmp[0], s2), c_feature[2]], axis=-1),
        p["s_c_merge"][1], relu=True))
    f_mask.append(cmask(2, f_tmp[-1]))

    s1 = c_feature[1].shape[1:3]
    f_tmp.append(conv1(jnp.concatenate(
        [trans_feature[2], bilinear_resize(f_tmp[2], s1), bilinear_resize(f_tmp[1], s1),
         bilinear_resize(f_tmp[0], s1), c_feature[1]], axis=-1),
        p["s_c_merge"][2], relu=True))
    f_mask.append(cmask(1, f_tmp[-1]))

    # --- mask/edge merge loop: shared c_edge conv batched over all f_mask -----
    cedge_fm = conv_apply(f_mask, p["c_edge"], relu=True)
    tmp_feature = []
    for j in range(len(f_mask)):
        tmp = bilinear_resize(cedge_fm[j], edge_d_feature.shape[1:3]) + edge_d_feature
        # faithful to self.m_e_merge_conv[0][j]: indexing single layers of the Sequential
        if j == 0:
            tmp_f = conv1(tmp, p["m_e_conv0"], relu=False)
        elif j == 1:
            tmp_f = batchnorm_eval(tmp, p["m_e_bn1"])
        elif j == 2:
            tmp_f = jnp.maximum(tmp, 0.0)
        else:
            tmp_f = conv1(tmp, p["m_e_conv3"], relu=False)
        tmp_feature.append(tmp_f)

    xt_hw = x_trans.shape[1:3]
    for tf in tmp_feature:
        cls_inputs.append(bilinear_resize(tf, xt_hw))            # -> cls_out[1..4]

    tmp_fea = tmp_feature[0]
    base_hw = tmp_feature[0].shape[1:3]
    for i in range(len(tmp_feature) - 1):
        tmp_fea = jnp.maximum(tmp_fea + bilinear_resize(tmp_feature[i + 1], base_hw), 0.0)

    # --- batched shared-weight heads ------------------------------------------
    um_out = head_apply(f_mask, p["up_mask"])                      # 4 inputs, one matmul
    umf_out = head_apply([tmp_tr] + tmp_feature + [tmp_fea], p["up_mask_final"])  # 6 inputs
    cls_out = cls_apply(cls_inputs, p)                             # fused cls1+pool kernel

    mask_out = [bilinear_resize(umf_out[0], x_size)]               # up_mask_final(tmp_tr)
    mask_out += [bilinear_resize(o, x_size) for o in um_out]       # up_mask(f_mask[0..3])
    mask_out += [bilinear_resize(o, x_size) for o in umf_out[1:5]] # up_mask_final(tmp_f j)
    mask_out.append(bilinear_resize(umf_out[5], x_size))           # up_mask_final(tmp_fea)

    return mask_out, edge_out, cls_out


def make_forward(params):
    def fwd(c_feature, t_feature, x_size):
        return tcseg_forward(params, c_feature, t_feature, x_size)
    # x_size is static; params are closed over (their BN-folded matrices constant-fold)
    return jax.jit(fwd, static_argnums=(2,))


# ----------------------------------------------------------------------------
# Main
# ----------------------------------------------------------------------------

if __name__ == "__main__":
    params = init_params()
    forward = make_forward(params)

    key = jax.random.PRNGKey(0)
    k0, k1, k2, k3, k4, k5 = jax.random.split(key, 6)
    B = 2
    # c_feature pyramid (NHWC). c_feature[3]/[2]/[1] spatial sizes are fixed by the
    # transformer branch (14 -> 28 -> 56 via x2 upsampling); 768-dim 14x14 tokens are
    # hard-coded by the module's reshape.
    c_feature = [
        jax.random.normal(k0, (B, 28, 28, 32), jnp.float32),
        jax.random.normal(k1, (B, 56, 56, 64), jnp.float32),
        jax.random.normal(k2, (B, 28, 28, 64), jnp.float32),
        jax.random.normal(k3, (B, 14, 14, 64), jnp.float32),
        jax.random.normal(k4, (B, 7, 7, 64), jnp.float32),
    ]
    t_feature = jax.random.normal(k5, (B, 197, 768), jnp.float32)
    x_size = (56, 56)

    # quick numerical sanity check: fused Pallas matmul vs bf16 XLA reference
    xs = jax.random.normal(k0, (300, 288), jnp.float32)
    ws = jax.random.normal(k1, (288, 64), jnp.float32) * 0.05
    bs = jax.random.normal(k2, (64,), jnp.float32) * 0.01
    got = jax.jit(lambda a, b, c: pallas_dense(a, b, c, True))(xs, ws, bs)
    ref = jnp.maximum(jnp.dot(xs.astype(jnp.bfloat16), ws.astype(jnp.bfloat16),
                              preferred_element_type=jnp.float32) + bs, 0.0)
    assert float(jnp.max(jnp.abs(got - ref))) < 5e-2, "pallas matmul mismatch"

    # quick sanity check: fused cls1 + pool kernel vs XLA reference (tests j>0 accumulate)
    n_img, sp = 2, 16384
    xc = jax.random.normal(k3, (n_img * sp, 32), jnp.float32)
    wc = jax.random.normal(k4, (32, 128), jnp.float32) * 0.05
    bc = jax.random.normal(k5, (128,), jnp.float32) * 0.01
    got_p = jax.jit(lambda a, b, c: pallas_cls1_pool(a, b, c, n_img, sp))(xc, wc, bc)
    act = jnp.maximum(jnp.dot(xc.astype(jnp.bfloat16), wc.astype(jnp.bfloat16),
                              preferred_element_type=jnp.float32) + bc, 0.0)
    ref_p = act.reshape(n_img, sp, 128).sum(axis=1)
    rel = float(jnp.max(jnp.abs(got_p - ref_p) / (jnp.abs(ref_p) + 1.0)))
    assert rel < 2e-2, "pallas cls1+pool mismatch"

    mask_out, edge_out, cls_out = forward(c_feature, t_feature, x_size)
    for arr in mask_out + edge_out + cls_out:
        jax.block_until_ready(arr)

    # sanity: expected output structure from the reference forward
    assert len(mask_out) == 10 and len(edge_out) == 1 and len(cls_out) == 5
    assert all(m.shape == (B, x_size[0], x_size[1], 1) for m in mask_out)
    assert all(c.shape == (B, 7) for c in cls_out)

    print("KERNEL_OK")
</pallas_src>

<mosaic_0001>
module attributes {stable_mosaic.version = 11 : i64} {
  func.func @_mm_kernel(%arg0: i32, %arg1: memref<256x288xbf16, #tpu.memory_space<vmem>>, %arg2: memref<288x64xbf16, #tpu.memory_space<vmem>>, %arg3: memref<1x64xf32, #tpu.memory_space<vmem>>, %arg4: memref<256x64xf32, #tpu.memory_space<vmem>>) attributes {dimension_semantics = [#tpu.dimension_semantics<parallel>], iteration_bounds = array<i64: 2>, scalar_prefetch = 0 : i64, scratch_operands = 0 : i64, tpu.core_type = #tpu.core_type<tc>, window_params = [{transform_indices = @transform_0, window_bounds = array<i64: 256, 288>}, {pipeline_mode = #tpu.pipeline_mode<synchronous>, transform_indices = @transform_1, window_bounds = array<i64: 288, 64>}, {pipeline_mode = #tpu.pipeline_mode<synchronous>, transform_indices = @transform_2, window_bounds = array<i64: 1, 64>}, {transform_indices = @transform_3, window_bounds = array<i64: 256, 64>}]} {
    %c0 = arith.constant 0 : index
    %c0_0 = arith.constant 0 : index
    %0 = vector.load %arg1[%c0, %c0_0] : memref<256x288xbf16, #tpu.memory_space<vmem>>, vector<256x288xbf16>
    %c0_1 = arith.constant 0 : index
    %c0_2 = arith.constant 0 : index
    %1 = vector.load %arg2[%c0_1, %c0_2] : memref<288x64xbf16, #tpu.memory_space<vmem>>, vector<288x64xbf16>
    %cst = arith.constant dense<0.000000e+00> : vector<256x64xf32>
    %2 = tpu.matmul %0, %1, %cst {dimension_numbers = #tpu.dot_dimension_numbers<[1], [0], [0], [1], [0, 0, 1, 1], [], []>} : vector<256x288xbf16>, vector<288x64xbf16>, vector<256x64xf32> -> vector<256x64xf32>
    %c0_3 = arith.constant 0 : index
    %c0_4 = arith.constant 0 : index
    %3 = vector.load %arg3[%c0_3, %c0_4] : memref<1x64xf32, #tpu.memory_space<vmem>>, vector<1x64xf32>
    %4 = vector.broadcast %3 : vector<1x64xf32> to vector<256x64xf32>
    %5 = arith.addf %2, %4 : vector<256x64xf32>
    %cst_5 = arith.constant 0.000000e+00 : f32
    %6 = vector.broadcast %cst_5 : f32 to vector<256x64xf32>
    %7 = arith.maximumf %5, %6 : vector<256x64xf32>
    %c0_6 = arith.constant 0 : index
    %c0_7 = arith.constant 0 : index
    %8 = vector.load %arg4[%c0_6, %c0_7] : memref<256x64xf32, #tpu.memory_space<vmem>>, vector<256x64xf32>
    tpu.vector_store %arg4[%c0_6, %c0_7], %7 {strides = array<i32>} : memref<256x64xf32, #tpu.memory_space<vmem>>, vector<256x64xf32>,
    return
  }
  func.func @transform_0(%arg0: i32) -> (i32, i32) {
    %c0_i32 = arith.constant 0 : i32
    %c0_i32_0 = arith.constant 0 : i32
    return %arg0, %c0_i32 : i32, i32
  }
  func.func @transform_1(%arg0: i32) -> (i32, i32) {
    %c0_i32 = arith.constant 0 : i32
    %c0_i32_0 = arith.constant 0 : i32
    %c0_i32_1 = arith.constant 0 : i32
    return %c0_i32, %c0_i32_0 : i32, i32
  }
  func.func @transform_2(%arg0: i32) -> (i32, i32) {
    %c0_i32 = arith.constant 0 : i32
    %c0_i32_0 = arith.constant 0 : i32
    %c0_i32_1 = arith.constant 0 : i32
    return %c0_i32, %c0_i32_0 : i32, i32
  }
  func.func @transform_3(%arg0: i32) -> (i32, i32) {
    %c0_i32 = arith.constant 0 : i32
    %c0_i32_0 = arith.constant 0 : i32
    return %arg0, %c0_i32 : i32, i32
  }
}

</mosaic_0001>

<llo_original>
// kernel: _lambda_.1
$region0: #{_lambda_.1}
  #allocation0 [shape = 'u32[]', space=smem, size = 0x4, offset = 0x4, fixed_abs, tag = 'smem constant byte address 0x4 - core index']
  #allocation1 [shape = 'u32[72,128]{1,0:T(1,128)}', space=vmem, size = 0x9000, scoped, tag = 'internal scratch']
  %s0 = inlined_call_operand.vmem [shape: bf16[300,288], index: 0, kind: input, shape index: {}]
  %s1 = inlined_call_operand.vmem [shape: bf16[288,64], index: 1, kind: input, shape index: {}]
  %s2 = inlined_call_operand.vmem [shape: f32[1,64], index: 2, kind: input, shape index: {}]
  %s3 = inlined_call_operand.vmem [shape: f32[300,64], index: 3, kind: output, shape index: {}]
  %s4 = sld [smem:[#allocation0]]
  $region93: #{_lambda_.1} parent=0
    _
  %s6 = ssub.s32 1, %s4
  %s7 = scalar_select 0, %s6, %s4
  $region1: #{_lambda_.1} parent=0
    #allocation2 [shape = 'u8[262144]{0}', space=vmem, size = 0x40000, scoped, tag = 'output window, operand 0']
    loop: start=0, step=1, limit=4
    $region2: #{_lambda_.1} parent=1 // loop_pre_header
      _
    $region3: #{_lambda_.1} parent=1 // loop_header
      %s9 = sphi 0, %s13
      %p10 = scmp.ge.s32.totalorder %s9, 4
      %s19 = sphi 0, %s21
      %s22 = sphi 0, %s19
      %s23 = sphi 0, %s22
      %s39 = sphi 0, %s23
      %s43 = sphi 0, %s43
      %s45 = sphi 0, %s43
      %s46 = sphi 0, %s45
      %s60 = sphi 0, %s46
      %s64 = sphi 0, %s64
      %s66 = sphi 0, %s64
      %s67 = sphi 0, %s66
      %s81 = sphi 0, %s67
      %s87 = sphi 0, %s89
      %s90 = sphi 0, %s87
      %s91 = sphi 0, %s90
      %s107 = sphi 0, %s91
    $region4: #{_lambda_.1} parent=1 // loop_header_branch
      %12 = sbr.rel (%p10) target = $region8
    $region5: #{_lambda_.1} parent=1 // loop_body
      %s14 = ssub.s32 %s9, 1
      %s15 = ssub.s32 %s9, 2
      %s16 = sadd.s32 %s9, 1
      %s17 = ssub.s32 %s9, %s16
      %p18 = scmp.eq.s32.totalorder %s17, 0
      %s20 = sadd.s32 %s19, 1
      %s21 = scalar_select %p18, %s19, %s20
      %p24 = pneg %p18
      %p25 = scmp.eq.s32.totalorder %s9, 1
      %p26 = por %p24, %p25
      %p27 = scmp.ne.s32.totalorder %s19, %s22
      %p28 = scmp.eq.s32.totalorder %s9, 0
      %p29 = por %p27, %p28
      %p30 = scmp.ne.s32.totalorder %s19, %s22
      %p31 = scmp.eq.s32.totalorder %s14, 1
      %p32 = por %p30, %p31
      %p33 = scmp.ne.s32.totalorder %s22, %s23
      %p34 = scmp.eq.s32.totalorder %s14, 0
      %p35 = por %p33, %p34
      %p36 = scmp.ne.s32.totalorder %s22, %s23
      %p37 = scmp.eq.s32.totalorder %s15, 1
      %p38 = por %p36, %p37
      %p40 = scmp.ne.s32.totalorder %s23, %s39
      %p41 = scmp.eq.s32.totalorder %s15, 0
      %p42 = por %p40, %p41
      %s44 = sadd.s32 %s43, 1
      %p47 = scmp.eq.s32.totalorder %s9, 1
      %p48 = scmp.ne.s32.totalorder %s43, %s45
      %p49 = scmp.eq.s32.totalorder %s9, 0
      %p50 = por %p48, %p49
      %p51 = scmp.ne.s32.totalorder %s43, %s45
      %p52 = scmp.eq.s32.totalorder %s14, 1
      %p53 = por %p51, %p52
      %p54 = scmp.ne.s32.totalorder %s45, %s46
      %p55 = scmp.eq.s32.totalorder %s14, 0
      %p56 = por %p54, %p55
      %p57 = scmp.ne.s32.totalorder %s45, %s46
      %p58 = scmp.eq.s32.totalorder %s15, 1
      %p59 = por %p57, %p58
      %p61 = scmp.ne.s32.totalorder %s46, %s60
      %p62 = scmp.eq.s32.totalorder %s15, 0
      %p63 = por %p61, %p62
      %s65 = sadd.s32 %s64, 1
      %p68 = scmp.eq.s32.totalorder %s9, 1
      %p69 = scmp.ne.s32.totalorder %s64, %s66
      %p70 = scmp.eq.s32.totalorder %s9, 0
      %p71 = por %p69, %p70
      %p72 = scmp.ne.s32.totalorder %s64, %s66
      %p73 = scmp.eq.s32.totalorder %s14, 1
      %p74 = por %p72, %p73
      %p75 = scmp.ne.s32.totalorder %s66, %s67
      %p76 = scmp.eq.s32.totalorder %s14, 0
      %p77 = por %p75, %p76
      %p78 = scmp.ne.s32.totalorder %s66, %s67
      %p79 = scmp.eq.s32.totalorder %s15, 1
      %p80 = por %p78, %p79
      %p82 = scmp.ne.s32.totalorder %s67, %s81
      %p83 = scmp.eq.s32.totalorder %s15, 0
      %p84 = por %p82, %p83
      %s85 = ssub.s32 %s9, %s16
      %p86 = scmp.eq.s32.totalorder %s85, 0
      %s88 = sadd.s32 %s87, 1
      %s89 = scalar_select %p86, %s87, %s88
      %p92 = pneg %p86
      %p93 = scmp.eq.s32.totalorder %s9, 1
      %p94 = por %p92, %p93
      %p95 = scmp.ne.s32.totalorder %s87, %s90
      %p96 = scmp.eq.s32.totalorder %s9, 0
      %p97 = por %p95, %p96
      %p98 = scmp.ne.s32.totalorder %s87, %s90
      %p99 = scmp.eq.s32.totalorder %s14, 1
      %p100 = por %p98, %p99
      %p101 = scmp.ne.s32.totalorder %s90, %s91
      %p102 = scmp.eq.s32.totalorder %s14, 0
      %p103 = por %p101, %p102
      %p104 = scmp.ne.s32.totalorder %s90, %s91
      %p105 = scmp.eq.s32.totalorder %s15, 1
      %p106 = por %p104, %p105
      %p108 = scmp.ne.s32.totalorder %s91, %s107
      %p109 = scmp.eq.s32.totalorder %s15, 0
      %p110 = por %p108, %p109
      %p111 = scmp.le.s32.totalorder 1, %s9
      %p112 = scmp.lt.s32.totalorder %s9, 3
      %p113 = pnand %p111, %p112
      %p114 = pneg %p113
      // Predicated region
      $region9: #{_lambda_.1} parent=5 // pred_check
        _
      $region10: #{_lambda_.1} parent=5 // pred_check_branch
        %116 = sbr.rel (%p113) target = $region12
      $region11: #{_lambda_.1} parent=5 // pred_region
        %s117 = ssub.s32 %s9, 1
        // Predicated region
        $region13: #{_lambda_.1} parent=11 // pred_check
          %p118 = pneg %p56
        $region14: #{_lambda_.1} parent=11 // pred_check_branch
          %120 = sbr.rel (%p118) target = $region16
        $region15: #{_lambda_.1} parent=11 // pred_region
          _
        $region16: #{_lambda_.1} parent=11 // pred_fallthru
          _
        // Predicated region
        $region17: #{_lambda_.1} parent=11 // pred_check
          %p121 = pneg %p77
        $region18: #{_lambda_.1} parent=11 // pred_check_branch
          %123 = sbr.rel (%p121) target = $region20
        $region19: #{_lambda_.1} parent=11 // pred_region
          _
        $region20: #{_lambda_.1} parent=11 // pred_fallthru
          _
      $region12: #{_lambda_.1} parent=5 // pred_fallthru
        _
      %p124 = scmp.lt.s32.totalorder %s9, 2
      // Predicated region
      $region21: #{_lambda_.1} parent=5 // pred_check
        %p125 = pneg %p124
      $region22: #{_lambda_.1} parent=5 // pred_check_branch
        %127 = sbr.rel (%p125) target = $region24
      $region23: #{_lambda_.1} parent=5 // pred_region
        // Predicated region
        $region25: #{_lambda_.1} parent=23 // pred_check
          %p128 = pneg %p29
        $region26: #{_lambda_.1} parent=23 // pred_check_branch
          %130 = sbr.rel (%p128) target = $region28
        $region27: #{_lambda_.1} parent=23 // pred_region
          %s131 = smul.u32 32, %s9
          %s132 = ssub.s32 38, %s131
          %p133 = scmp.lt.s32.totalorder %s132, 32
          %s134 = scalar_select %p133, %s132, 32
          %s135 = smul.u32 4, %s134
          %s136 = smul.u32 %s135, 3
          %p137 = scmp.lt.s32.totalorder %s131, 37
          %s138 = scalar_select %p137, %s131, 37
          %s139 = smul.addr %s138, 3
          %s140 = smul.addr %s139, 4
          %s141 = scalar_lea.vmem %s0, %s140
          %s142 = smul.u32 32, %s9
          %s143 = ssub.s32 38, %s142
          %p144 = scmp.lt.s32.totalorder %s143, 32
          %s145 = scalar_select %p144, %s143, 32
          %s146 = smul.u32 4, %s145
          %s147 = smul.u32 %s146, 3
        $region28: #{_lambda_.1} parent=23 // pred_fallthru
          _
      $region24: #{_lambda_.1} parent=5 // pred_fallthru
        _
      %p148 = scmp.le.s32.totalorder 1, %s9
      %p149 = scmp.lt.s32.totalorder %s9, 3
      %p150 = pnand %p148, %p149
      %p151 = pneg %p150
      // Predicated region
      $region29: #{_lambda_.1} parent=5 // pred_check
        _
      $region30: #{_lambda_.1} parent=5 // pred_check_branch
        %153 = sbr.rel (%p150) target = $region32
      $region31: #{_lambda_.1} parent=5 // pred_region
        %s154 = ssub.s32 %s9, 1
        %s155 = smul.u32 32, %s14
        %s156 = ssub.s32 38, %s155
        %p157 = scmp.lt.s32.totalorder %s156, 32
        %s158 = scalar_select %p157, %s156, 32
        %s159 = smul.u32 4, %s158
        %s160 = smul.u32 %s159, 3
        %p161 = scmp.lt.s32.totalorder %s155, 37
        %s162 = scalar_select %p161, %s155, 37
        %s163 = smul.addr %s162, 3
        %s164 = smul.addr %s163, 4
        %s165 = scalar_lea.vmem %s0, %s164
        %p166 = pneg %p35
        %p167 = pneg %p32
        %p168 = pneg %p56
        %p169 = pneg %p53
        %p170 = pneg %p77
        %p171 = pneg %p74
        %p172 = pneg %p103
        %p173 = pneg %p100
        %s174 = sand.u32 %s90, 1
        %s175 = sand.u32 %s90, 1
        %s176 = smul.addr %s175, 256
        %s177 = scalar_lea.vmem [#allocation2], %s176
        %s178 = smul.u32 32, %s14
        %s179 = ssub.s32 38, %s178
        %p180 = scmp.lt.s32.totalorder %s179, 32
        %s181 = scalar_select %p180, %s179, 32
        %s182 = smul.u32 4, %s181
        %s183 = smul.u32 %s182, 3
        %p184 = scmp.lt.s32.totalorder %s178, 37
        %s185 = scalar_select %p184, %s178, 37
        %s186 = smul.addr %s185, 3
        %s187 = smul.addr %s186, 4
        %s188 = scalar_lea.vmem %s0, %s187
        %s189 = smul.u32 32, %s14
        %s190 = ssub.s32 38, %s189
        %p191 = scmp.lt.s32.totalorder %s190, 32
        %s192 = scalar_select %p191, %s190, 32
        %s193 = smul.u32 4, %s192
        %s194 = smul.u32 %s193, 3
        %s195 = smul.u32 32, %s14
        %s196 = ssub.s32 38, %s195
        %p197 = scmp.lt.s32.totalorder %s196, 32
        %s198 = scalar_select %p197, %s196, 32
        %s199 = smul.u32 8, %s198
        %v201 = vld [vmem:[%s188] sm:$0xff]
        %v202 = vld [vmem:[%s188 + $0x8] sm:$0xf]
        %v203 = vld [vmem:[%s188 + $0xc] sm:$0xff]
        %v204 = vld [vmem:[%s188 + $0x14] sm:$0xf]
        %v205 = vld [vmem:[%s188 + $0x18] sm:$0xff]
        %v206 = vld [vmem:[%s188 + $0x20] sm:$0xf]
        %v207 = vld [vmem:[%s188 + $0x24] sm:$0xff]
        %v208 = vld [vmem:[%s188 + $0x2c] sm:$0xf]
        %v209 = vld [vmem:[%s188 + $0x30] sm:$0xff]
        %v210 = vld [vmem:[%s188 + $0x38] sm:$0xf]
        %v211 = vld [vmem:[%s188 + $0x3c] sm:$0xff]
        %v212 = vld [vmem:[%s188 + $0x44] sm:$0xf]
        %v213 = vld [vmem:[%s188 + $0x48] sm:$0xff]
        %v214 = vld [vmem:[%s188 + $0x50] sm:$0xf]
        %v215 = vld [vmem:[%s188 + $0x54] sm:$0xff]
        %v216 = vld [vmem:[%s188 + $0x5c] sm:$0xf]
        %v217 = vld [vmem:[%s188 + $0x60] sm:$0xff]
        %v218 = vld [vmem:[%s188 + $0x68] sm:$0xf]
        %v219 = vld [vmem:[%s188 + $0x6c] sm:$0xff]
        %v220 = vld [vmem:[%s188 + $0x74] sm:$0xf]
        %v221 = vld [vmem:[%s188 + $0x78] sm:$0xff]
        %v222 = vld [vmem:[%s188 + $0x80] sm:$0xf]
        %v223 = vld [vmem:[%s188 + $0x84] sm:$0xff]
        %v224 = vld [vmem:[%s188 + $0x8c] sm:$0xf]
        %v225 = vld [vmem:[%s188 + $0x90] sm:$0xff]
        %v226 = vld [vmem:[%s188 + $0x98] sm:$0xf]
        %v227 = vld [vmem:[%s188 + $0x9c] sm:$0xff]
        %v228 = vld [vmem:[%s188 + $0xa4] sm:$0xf]
        %v229 = vld [vmem:[%s188 + $0xa8] sm:$0xff]
        %v230 = vld [vmem:[%s188 + $0xb0] sm:$0xf]
        %v231 = vld [vmem:[%s188 + $0xb4] sm:$0xff]
        %v232 = vld [vmem:[%s188 + $0xbc] sm:$0xf]
        %v233 = vld [vmem:[%s188 + $0xc0] sm:$0xff]
        %v234 = vld [vmem:[%s188 + $0xc8] sm:$0xf]
        %v235 = vld [vmem:[%s188 + $0xcc] sm:$0xff]
        %v236 = vld [vmem:[%s188 + $0xd4] sm:$0xf]
        %v237 = vld [vmem:[%s188 + $0xd8] sm:$0xff]
        %v238 = vld [vmem:[%s188 + $0xe0] sm:$0xf]
        %v239 = vld [vmem:[%s188 + $0xe4] sm:$0xff]
        %v240 = vld [vmem:[%s188 + $0xec] sm:$0xf]
        %v241 = vld [vmem:[%s188 + $0xf0] sm:$0xff]
        %v242 = vld [vmem:[%s188 + $0xf8] sm:$0xf]
        %v243 = vld [vmem:[%s188 + $0xfc] sm:$0xff]
        %v244 = vld [vmem:[%s188 + $0x104] sm:$0xf]
        %v245 = vld [vmem:[%s188 + $0x108] sm:$0xff]
        %v246 = vld [vmem:[%s188 + $0x110] sm:$0xf]
        %v247 = vld [vmem:[%s188 + $0x114] sm:$0xff]
        %v248 = vld [vmem:[%s188 + $0x11c] sm:$0xf]
        %v249 = vld [vmem:[%s188 + $0x120] sm:$0xff]
        %v250 = vld [vmem:[%s188 + $0x128] sm:$0xf]
        %v251 = vld [vmem:[%s188 + $0x12c] sm:$0xff]
        %v252 = vld [vmem:[%s188 + $0x134] sm:$0xf]
        %v253 = vld [vmem:[%s188 + $0x138] sm:$0xff]
        %v254 = vld [vmem:[%s188 + $0x140] sm:$0xf]
        %v255 = vld [vmem:[%s188 + $0x144] sm:$0xff]
        %v256 = vld [vmem:[%s188 + $0x14c] sm:$0xf]
        %v257 = vld [vmem:[%s188 + $0x150] sm:$0xff]
        %v258 = vld [vmem:[%s188 + $0x158] sm:$0xf]
        %v259 = vld [vmem:[%s188 + $0x15c] sm:$0xff]
        %v260 = vld [vmem:[%s188 + $0x164] sm:$0xf]
        %v261 = vld [vmem:[%s188 + $0x168] sm:$0xff]
        %v262 = vld [vmem:[%s188 + $0x170] sm:$0xf]
        %v263 = vld [vmem:[%s188 + $0x174] sm:$0xff]
        %v264 = vld [vmem:[%s188 + $0x17c] sm:$0xf]
        %v265 = vld [vmem:[%s1] sm:$0xf]
        %v266 = vld [vmem:[%s1 + $0x4] sm:$0xf]
        %v267 = vld [vmem:[%s1 + $0x8] sm:$0xf]
        %v268 = vld [vmem:[%s1 + $0xc] sm:$0xf]
        %v269 = vld [vmem:[%s1 + $0x10] sm:$0xf]
        %v270 = vld [vmem:[%s1 + $0x14] sm:$0xf]
        %v271 = vld [vmem:[%s1 + $0x18] sm:$0xf]
        %v272 = vld [vmem:[%s1 + $0x1c] sm:$0xf]
        %v273 = vld [vmem:[%s1 + $0x20] sm:$0xf]
        %v274 = vld [vmem:[%s1 + $0x24] sm:$0xf]
        %v275 = vld [vmem:[%s1 + $0x28] sm:$0xf]
        %v276 = vld [vmem:[%s1 + $0x2c] sm:$0xf]
        %v277 = vld [vmem:[%s1 + $0x30] sm:$0xf]
        %v278 = vld [vmem:[%s1 + $0x34] sm:$0xf]
        %v279 = vld [vmem:[%s1 + $0x38] sm:$0xf]
        %v280 = vld [vmem:[%s1 + $0x3c] sm:$0xf]
        %v281 = vld [vmem:[%s1 + $0x40] sm:$0xf]
        %v282 = vld [vmem:[%s1 + $0x44] sm:$0xf]
        %v283 = vld [vmem:[%s1 + $0x48] sm:$0xf]
        %v284 = vld [vmem:[%s1 + $0x4c] sm:$0xf]
        %v285 = vld [vmem:[%s1 + $0x50] sm:$0xf]
        %v286 = vld [vmem:[%s1 + $0x54] sm:$0xf]
        %v287 = vld [vmem:[%s1 + $0x58] sm:$0xf]
        %v288 = vld [vmem:[%s1 + $0x5c] sm:$0xf]
        %v289 = vld [vmem:[%s1 + $0x60] sm:$0xf]
        %v290 = vld [vmem:[%s1 + $0x64] sm:$0xf]
        %v291 = vld [vmem:[%s1 + $0x68] sm:$0xf]
        %v292 = vld [vmem:[%s1 + $0x6c] sm:$0xf]
        %v293 = vld [vmem:[%s1 + $0x70] sm:$0xf]
        %v294 = vld [vmem:[%s1 + $0x74] sm:$0xf]
        %v295 = vld [vmem:[%s1 + $0x78] sm:$0xf]
        %v296 = vld [vmem:[%s1 + $0x7c] sm:$0xf]
        %v297 = vld [vmem:[%s1 + $0x80] sm:$0xf]
        %v298 = vld [vmem:[%s1 + $0x84] sm:$0xf]
        %v299 = vld [vmem:[%s1 + $0x88] sm:$0xf]
        %v300 = vld [vmem:[%s1 + $0x8c] sm:$0xf]
        %v301 = vld [vmem:[%s2] sm:$0x1]
        %v303 = vperm.slane %v301, 0
        %v369 = vunpack.c.l.b16 %v201
        %v370 = vunpack.c.h.b16 %v201
        %v371 = vunpack.c.l.b16 %v202
        %v372 = vunpack.c.l.b16 %v203
        %v373 = vunpack.c.h.b16 %v203
        %v374 = vunpack.c.l.b16 %v204
        %v375 = vunpack.c.l.b16 %v205
        %v376 = vunpack.c.h.b16 %v205
        %v377 = vunpack.c.l.b16 %v206
        %v378 = vunpack.c.l.b16 %v207
        %v379 = vunpack.c.h.b16 %v207
        %v380 = vunpack.c.l.b16 %v208
        %v381 = vunpack.c.l.b16 %v209
        %v382 = vunpack.c.h.b16 %v209
        %v383 = vunpack.c.l.b16 %v210
        %v384 = vunpack.c.l.b16 %v211
        %v385 = vunpack.c.h.b16 %v211
        %v386 = vunpack.c.l.b16 %v212
        %v387 = vunpack.c.l.b16 %v213
        %v388 = vunpack.c.h.b16 %v213
        %v389 = vunpack.c.l.b16 %v214
        %v390 = vunpack.c.l.b16 %v215
        %v391 = vunpack.c.h.b16 %v215
        %v392 = vunpack.c.l.b16 %v216
        %v393 = vunpack.c.l.b16 %v217
        %v394 = vunpack.c.h.b16 %v217
        %v395 = vunpack.c.l.b16 %v218
        %v396 = vunpack.c.l.b16 %v219
        %v397 = vunpack.c.h.b16 %v219
        %v398 = vunpack.c.l.b16 %v220
        %v399 = vunpack.c.l.b16 %v221
        %v400 = vunpack.c.h.b16 %v221
        %v401 = vunpack.c.l.b16 %v222
        %v402 = vunpack.c.l.b16 %v223
        %v403 = vunpack.c.h.b16 %v223
        %v404 = vunpack.c.l.b16 %v224
        %v405 = vunpack.c.l.b16 %v225
        %v406 = vunpack.c.h.b16 %v225
        %v407 = vunpack.c.l.b16 %v226
        %v408 = vunpack.c.l.b16 %v227
        %v409 = vunpack.c.h.b16 %v227
        %v410 = vunpack.c.l.b16 %v228
        %v411 = vunpack.c.l.b16 %v229
        %v412 = vunpack.c.h.b16 %v229
        %v413 = vunpack.c.l.b16 %v230
        %v414 = vunpack.c.l.b16 %v231
        %v415 = vunpack.c.h.b16 %v231
        %v416 = vunpack.c.l.b16 %v232
        %v417 = vunpack.c.l.b16 %v233
        %v418 = vunpack.c.h.b16 %v233
        %v419 = vunpack.c.l.b16 %v234
        %v420 = vunpack.c.l.b16 %v235
        %v421 = vunpack.c.h.b16 %v235
        %v422 = vunpack.c.l.b16 %v236
        %v423 = vunpack.c.l.b16 %v237
        %v424 = vunpack.c.h.b16 %v237
        %v425 = vunpack.c.l.b16 %v238
        %v426 = vunpack.c.l.b16 %v239
        %v427 = vunpack.c.h.b16 %v239
        %v428 = vunpack.c.l.b16 %v240
        %v429 = vunpack.c.l.b16 %v241
        %v430 = vunpack.c.h.b16 %v241
        %v431 = vunpack.c.l.b16 %v242
        %v432 = vunpack.c.l.b16 %v243
        %v433 = vunpack.c.h.b16 %v243
        %v434 = vunpack.c.l.b16 %v244
        %v435 = vunpack.c.l.b16 %v245
        %v436 = vunpack.c.h.b16 %v245
        %v437 = vunpack.c.l.b16 %v246
        %v438 = vunpack.c.l.b16 %v247
        %v439 = vunpack.c.h.b16 %v247
        %v440 = vunpack.c.l.b16 %v248
        %v441 = vunpack.c.l.b16 %v249
        %v442 = vunpack.c.h.b16 %v249
        %v443 = vunpack.c.l.b16 %v250
        %v444 = vunpack.c.l.b16 %v251
        %v445 = vunpack.c.h.b16 %v251
        %v446 = vunpack.c.l.b16 %v252
        %v447 = vunpack.c.l.b16 %v253
        %v448 = vunpack.c.h.b16 %v253
        %v449 = vunpack.c.l.b16 %v254
        %v450 = vunpack.c.l.b16 %v255
        %v451 = vunpack.c.h.b16 %v255
        %v452 = vunpack.c.l.b16 %v256
        %v453 = vunpack.c.l.b16 %v257
        %v454 = vunpack.c.h.b16 %v257
        %v455 = vunpack.c.l.b16 %v258
        %v456 = vunpack.c.l.b16 %v259
        %v457 = vunpack.c.h.b16 %v259
        %v458 = vunpack.c.l.b16 %v260
        %v459 = vunpack.c.l.b16 %v261
        %v460 = vunpack.c.h.b16 %v261
        %v461 = vunpack.c.l.b16 %v262
        %v462 = vunpack.c.l.b16 %v263
        %v463 = vunpack.c.h.b16 %v263
        %v464 = vunpack.c.l.b16 %v264
        %v465 = vpack.c.b16 %v372, %v369
        %v466 = vpack.c.b16 %v373, %v370
        %v467 = vpack.c.b16 %v374, %v371
        %v468 = vpack.c.b16 %v378, %v375
        %v469 = vpack.c.b16 %v379, %v376
        %v470 = vpack.c.b16 %v380, %v377
        %v471 = vpack.c.b16 %v384, %v381
        %v472 = vpack.c.b16 %v385, %v382
        %v473 = vpack.c.b16 %v386, %v383
        %v474 = vpack.c.b16 %v390, %v387
        %v475 = vpack.c.b16 %v391, %v388
        %v476 = vpack.c.b16 %v392, %v389
        %v477 = vpack.c.b16 %v396, %v393
        %v478 = vpack.c.b16 %v397, %v394
        %v479 = vpack.c.b16 %v398, %v395
        %v480 = vpack.c.b16 %v402, %v399
        %v481 = vpack.c.b16 %v403, %v400
        %v482 = vpack.c.b16 %v404, %v401
        %v483 = vpack.c.b16 %v408, %v405
        %v484 = vpack.c.b16 %v409, %v406
        %v485 = vpack.c.b16 %v410, %v407
        %v486 = vpack.c.b16 %v414, %v411
        %v487 = vpack.c.b16 %v415, %v412
        %v488 = vpack.c.b16 %v416, %v413
        %v489 = vpack.c.b16 %v420, %v417
        %v490 = vpack.c.b16 %v421, %v418
        %v491 = vpack.c.b16 %v422, %v419
        %v492 = vpack.c.b16 %v426, %v423
        %v493 = vpack.c.b16 %v427, %v424
        %v494 = vpack.c.b16 %v428, %v425
        %v495 = vpack.c.b16 %v432, %v429
        %v496 = vpack.c.b16 %v433, %v430
        %v497 = vpack.c.b16 %v434, %v431
        %v498 = vpack.c.b16 %v438, %v435
        %v499 = vpack.c.b16 %v439, %v436
        %v500 = vpack.c.b16 %v440, %v437
        %v501 = vpack.c.b16 %v444, %v441
        %v502 = vpack.c.b16 %v445, %v442
        %v503 = vpack.c.b16 %v446, %v443
        %v504 = vpack.c.b16 %v450, %v447
        %v505 = vpack.c.b16 %v451, %v448
        %v506 = vpack.c.b16 %v452, %v449
        %v507 = vpack.c.b16 %v456, %v453
        %v508 = vpack.c.b16 %v457, %v454
        %v509 = vpack.c.b16 %v458, %v455
        %v510 = vpack.c.b16 %v462, %v459
        %v511 = vpack.c.b16 %v463, %v460
        %v512 = vpack.c.b16 %v464, %v461
        %v581 = vunpack.c.l.b16 %v265
        %v582 = vunpack.c.l.b16 %v266
        %v583 = vunpack.c.l.b16 %v267
        %v584 = vunpack.c.l.b16 %v268
        %v585 = vunpack.c.l.b16 %v269
        %v586 = vunpack.c.l.b16 %v270
        %v587 = vunpack.c.l.b16 %v271
        %v588 = vunpack.c.l.b16 %v272
        %v589 = vunpack.c.l.b16 %v273
        %v590 = vunpack.c.l.b16 %v274
        %v591 = vunpack.c.l.b16 %v275
        %v592 = vunpack.c.l.b16 %v276
        %v593 = vunpack.c.l.b16 %v277
        %v594 = vunpack.c.l.b16 %v278
        %v595 = vunpack.c.l.b16 %v279
        %v596 = vunpack.c.l.b16 %v280
        %v597 = vunpack.c.l.b16 %v281
        %v598 = vunpack.c.l.b16 %v282
        %v599 = vunpack.c.l.b16 %v283
        %v600 = vunpack.c.l.b16 %v284
        %v601 = vunpack.c.l.b16 %v285
        %v602 = vunpack.c.l.b16 %v286
        %v603 = vunpack.c.l.b16 %v287
        %v604 = vunpack.c.l.b16 %v288
        %v605 = vunpack.c.l.b16 %v289
        %v606 = vunpack.c.l.b16 %v290
        %v607 = vunpack.c.l.b16 %v291
        %v608 = vunpack.c.l.b16 %v292
        %v609 = vunpack.c.l.b16 %v293
        %v610 = vunpack.c.l.b16 %v294
        %v611 = vunpack.c.l.b16 %v295
        %v612 = vunpack.c.l.b16 %v296
        %v613 = vunpack.c.l.b16 %v297
        %v614 = vunpack.c.l.b16 %v298
        %v615 = vunpack.c.l.b16 %v299
        %v616 = vunpack.c.l.b16 %v300
        %v617 = vpack.c.b16 %v582, %v581
        %v618 = vpack.c.b16 %v584, %v583
        %v619 = vpack.c.b16 %v586, %v585
        %v620 = vpack.c.b16 %v588, %v587
        %v621 = vpack.c.b16 %v590, %v589
        %v622 = vpack.c.b16 %v592, %v591
        %v623 = vpack.c.b16 %v594, %v593
        %v624 = vpack.c.b16 %v596, %v595
        %v625 = vpack.c.b16 %v598, %v597
        %v626 = vpack.c.b16 %v600, %v599
        %v627 = vpack.c.b16 %v602, %v601
        %v628 = vpack.c.b16 %v604, %v603
        %v629 = vpack.c.b16 %v606, %v605
        %v630 = vpack.c.b16 %v608, %v607
        %v631 = vpack.c.b16 %v610, %v609
        %v632 = vpack.c.b16 %v612, %v611
        %v633 = vpack.c.b16 %v614, %v613
        %v634 = vpack.c.b16 %v616, %v615
        %vm653 = vcmask 261120
        %v655 = vsel %vm653, %v467, 0
        %v658 = vsel %vm653, %v470, 0
        %v661 = vsel %vm653, %v473, 0
        %v664 = vsel %vm653, %v476, 0
        %v667 = vsel %vm653, %v479, 0
        %v670 = vsel %vm653, %v482, 0
        %v673 = vsel %vm653, %v485, 0
        %v676 = vsel %vm653, %v488, 0
        %v679 = vsel %vm653, %v491, 0
        %v682 = vsel %vm653, %v494, 0
        %v685 = vsel %vm653, %v497, 0
        %v688 = vsel %vm653, %v500, 0
        %v691 = vsel %vm653, %v503, 0
        %v694 = vsel %vm653, %v506, 0
        %v697 = vsel %vm653, %v509, 0
        %v700 = vsel %vm653, %v512, 0
        %702 = vmatpush.bf16.msra.mxu0 %v624
        %703 = vmatpush.bf16.msra.mxu0 %v623
        %704 = vmatpush.bf16.msra.mxu0 %v622
        %705 = vmatpush.bf16.msra.mxu0 %v621
        %706 = vmatpush.bf16.msra.mxu0 %v620
        %707 = vmatpush.bf16.msra.mxu0 %v619
        %708 = vmatpush.bf16.msra.mxu0 %v618
        %709 = vmatpush.bf16.msra.mxu0 %v617
        %710 = vmatmul.bf16.gmra.mxu0 %v465
        %v711 = vpop.f32.mrf.mxu0
        %v712 = vadd.f32 %v303, %v711
        %v713 = vpop.f32.mrf.mxu0
        %v714 = vadd.f32 %v303, %v713
        %715 = vmatmul.bf16.gmra.mxu0 %v468
        %v716 = vpop.f32.mrf.mxu0
        %v717 = vadd.f32 %v303, %v716
        %v718 = vpop.f32.mrf.mxu0
        %v719 = vadd.f32 %v303, %v718
        %720 = vmatmul.bf16.gmra.mxu0 %v471
        %v721 = vpop.f32.mrf.mxu0
        %v722 = vadd.f32 %v303, %v721
        %v723 = vpop.f32.mrf.mxu0
        %v724 = vadd.f32 %v303, %v723
        %725 = vmatmul.bf16.gmra.mxu0 %v474
        %v726 = vpop.f32.mrf.mxu0
        %v727 = vadd.f32 %v303, %v726
        %v728 = vpop.f32.mrf.mxu0
        %v729 = vadd.f32 %v303, %v728
        %730 = vmatmul.bf16.gmra.mxu0 %v477
        %v731 = vpop.f32.mrf.mxu0
        %v732 = vadd.f32 %v303, %v731
        %v733 = vpop.f32.mrf.mxu0
        %v734 = vadd.f32 %v303, %v733
        %735 = vmatmul.bf16.gmra.mxu0 %v480
        %v736 = vpop.f32.mrf.mxu0
        %v737 = vadd.f32 %v303, %v736
        %v738 = vpop.f32.mrf.mxu0
        %v739 = vadd.f32 %v303, %v738
        %740 = vmatmul.bf16.gmra.mxu0 %v483
        %v741 = vpop.f32.mrf.mxu0
        %v742 = vadd.f32 %v303, %v741
        %v743 = vpop.f32.mrf.mxu0
        %v744 = vadd.f32 %v303, %v743
        %745 = vmatmul.bf16.gmra.mxu0 %v486
        %v746 = vpop.f32.mrf.mxu0
        %v747 = vadd.f32 %v303, %v746
        %v748 = vpop.f32.mrf.mxu0
        %v749 = vadd.f32 %v303, %v748
        %750 = vmatmul.bf16.gmra.mxu0 %v489
        %v751 = vpop.f32.mrf.mxu0
        %v752 = vadd.f32 %v303, %v751
        %v753 = vpop.f32.mrf.mxu0
        %v754 = vadd.f32 %v303, %v753
        %755 = vmatmul.bf16.gmra.mxu0 %v492
        %v756 = vpop.f32.mrf.mxu0
        %v757 = vadd.f32 %v303, %v756
        %v758 = vpop.f32.mrf.mxu0
        %v759 = vadd.f32 %v303, %v758
        %760 = vmatmul.bf16.gmra.mxu0 %v495
        %v761 = vpop.f32.mrf.mxu0
        %v762 = vadd.f32 %v303, %v761
        %v763 = vpop.f32.mrf.mxu0
        %v764 = vadd.f32 %v303, %v763
        %765 = vmatmul.bf16.gmra.mxu0 %v498
        %v766 = vpop.f32.mrf.mxu0
        %v767 = vadd.f32 %v303, %v766
        %v768 = vpop.f32.mrf.mxu0
        %v769 = vadd.f32 %v303, %v768
        %770 = vmatmul.bf16.gmra.mxu0 %v501
        %v771 = vpop.f32.mrf.mxu0
        %v772 = vadd.f32 %v303, %v771
        %v773 = vpop.f32.mrf.mxu0
        %v774 = vadd.f32 %v303, %v773
        %775 = vmatmul.bf16.gmra.mxu0 %v504
        %v776 = vpop.f32.mrf.mxu0
        %v777 = vadd.f32 %v303, %v776
        %v778 = vpop.f32.mrf.mxu0
        %v779 = vadd.f32 %v303, %v778
        %780 = vmatmul.bf16.gmra.mxu0 %v507
        %v781 = vpop.f32.mrf.mxu0
        %v782 = vadd.f32 %v303, %v781
        %v783 = vpop.f32.mrf.mxu0
        %v784 = vadd.f32 %v303, %v783
        %785 = vmatmul.bf16.gmra.mxu0 %v510
        %v786 = vpop.f32.mrf.mxu0
        %v787 = vadd.f32 %v303, %v786
        %v788 = vpop.f32.mrf.mxu0
        %v789 = vadd.f32 %v303, %v788
        %790 = vdwg.mxu0
        %791 = vmatpush.bf16.msra.mxu0 %v632
        %792 = vmatpush.bf16.msra.mxu0 %v631
        %793 = vmatpush.bf16.msra.mxu0 %v630
        %794 = vmatpush.bf16.msra.mxu0 %v629
        %795 = vmatpush.bf16.msra.mxu0 %v628
        %796 = vmatpush.bf16.msra.mxu0 %v627
        %797 = vmatpush.bf16.msra.mxu0 %v626
        %798 = vmatpush.bf16.msra.mxu0 %v625
        %799 = vmatmul.bf16.gmra.mxu0 %v466
        %v800 = vpop.f32.mrf.mxu0
        %v801 = vadd.f32 %v712, %v800
        %v802 = vpop.f32.mrf.mxu0
        %v803 = vadd.f32 %v714, %v802
        %804 = vmatmul.bf16.gmra.mxu0 %v469
        %v805 = vpop.f32.mrf.mxu0
        %v806 = vadd.f32 %v717, %v805
        %v807 = vpop.f32.mrf.mxu0
        %v808 = vadd.f32 %v719, %v807
        %809 = vmatmul.bf16.gmra.mxu0 %v472
        %v810 = vpop.f32.mrf.mxu0
        %v811 = vadd.f32 %v722, %v810
        %v812 = vpop.f32.mrf.mxu0
        %v813 = vadd.f32 %v724, %v812
        %814 = vmatmul.bf16.gmra.mxu0 %v475
        %v815 = vpop.f32.mrf.mxu0
        %v816 = vadd.f32 %v727, %v815
        %v817 = vpop.f32.mrf.mxu0
        %v818 = vadd.f32 %v729, %v817
        %819 = vmatmul.bf16.gmra.mxu0 %v478
        %v820 = vpop.f32.mrf.mxu0
        %v821 = vadd.f32 %v732, %v820
        %v822 = vpop.f32.mrf.mxu0
        %v823 = vadd.f32 %v734, %v822
        %824 = vmatmul.bf16.gmra.mxu0 %v481
        %v825 = vpop.f32.mrf.mxu0
        %v826 = vadd.f32 %v737, %v825
        %v827 = vpop.f32.mrf.mxu0
        %v828 = vadd.f32 %v739, %v827
        %829 = vmatmul.bf16.gmra.mxu0 %v484
        %v830 = vpop.f32.mrf.mxu0
        %v831 = vadd.f32 %v742, %v830
        %v832 = vpop.f32.mrf.mxu0
        %v833 = vadd.f32 %v744, %v832
        %834 = vmatmul.bf16.gmra.mxu0 %v487
        %v835 = vpop.f32.mrf.mxu0
        %v836 = vadd.f32 %v747, %v835
        %v837 = vpop.f32.mrf.mxu0
        %v838 = vadd.f32 %v749, %v837
        %839 = vmatmul.bf16.gmra.mxu0 %v490
        %v840 = vpop.f32.mrf.mxu0
        %v841 = vadd.f32 %v752, %v840
        %v842 = vpop.f32.mrf.mxu0
        %v843 = vadd.f32 %v754, %v842
        %844 = vmatmul.bf16.gmra.mxu0 %v493
        %v845 = vpop.f32.mrf.mxu0
        %v846 = vadd.f32 %v757, %v845
        %v847 = vpop.f32.mrf.mxu0
        %v848 = vadd.f32 %v759, %v847
        %849 = vmatmul.bf16.gmra.mxu0 %v496
        %v850 = vpop.f32.mrf.mxu0
        %v851 = vadd.f32 %v762, %v850
        %v852 = vpop.f32.mrf.mxu0
        %v853 = vadd.f32 %v764, %v852
        %854 = vmatmul.bf16.gmra.mxu0 %v499
        %v855 = vpop.f32.mrf.mxu0
        %v856 = vadd.f32 %v767, %v855
        %v857 = vpop.f32.mrf.mxu0
        %v858 = vadd.f32 %v769, %v857
        %859 = vmatmul.bf16.gmra.mxu0 %v502
        %v860 = vpop.f32.mrf.mxu0
        %v861 = vadd.f32 %v772, %v860
        %v862 = vpop.f32.mrf.mxu0
        %v863 = vadd.f32 %v774, %v862
        %864 = vmatmul.bf16.gmra.mxu0 %v505
        %v865 = vpop.f32.mrf.mxu0
        %v866 = vadd.f32 %v777, %v865
        %v867 = vpop.f32.mrf.mxu0
        %v868 = vadd.f32 %v779, %v867
        %869 = vmatmul.bf16.gmra.mxu0 %v508
        %v870 = vpop.f32.mrf.mxu0
        %v871 = vadd.f32 %v782, %v870
        %v872 = vpop.f32.mrf.mxu0
        %v873 = vadd.f32 %v784, %v872
        %874 = vmatmul.bf16.gmra.mxu0 %v511
        %v875 = vpop.f32.mrf.mxu0
        %v876 = vadd.f32 %v787, %v875
        %v877 = vpop.f32.mrf.mxu0
        %v878 = vadd.f32 %v789, %v877
        %879 = vdwg.mxu0
        %880 = vmatpush.bf16.msra.mxu0 0
        %881 = vmatpush.bf16.msra.mxu0 0
        %882 = vmatpush.bf16.msra.mxu0 0
        %883 = vmatpush.bf16.msra.mxu0 0
        %884 = vmatpush.bf16.msra.mxu0 0
        %885 = vmatpush.bf16.msra.mxu0 0
        %886 = vmatpush.bf16.msra.mxu0 %v634
        %887 = vmatpush.bf16.msra.mxu0 %v633
        %888 = vmatmul.bf16.gmra.mxu0 %v655
        %v889 = vpop.f32.mrf.mxu0
        %v890 = vadd.f32 %v801, %v889
        %v891 = vpop.f32.mrf.mxu0
        %v892 = vadd.f32 %v803, %v891
        %893 = vmatmul.bf16.gmra.mxu0 %v658
        %v894 = vpop.f32.mrf.mxu0
        %v895 = vadd.f32 %v806, %v894
        %v896 = vpop.f32.mrf.mxu0
        %v897 = vadd.f32 %v808, %v896
        %898 = vmatmul.bf16.gmra.mxu0 %v661
        %v899 = vpop.f32.mrf.mxu0
        %v900 = vadd.f32 %v811, %v899
        %v901 = vpop.f32.mrf.mxu0
        %v902 = vadd.f32 %v813, %v901
        %903 = vmatmul.bf16.gmra.mxu0 %v664
        %v904 = vpop.f32.mrf.mxu0
        %v905 = vadd.f32 %v816, %v904
        %v906 = vpop.f32.mrf.mxu0
        %v907 = vadd.f32 %v818, %v906
        %908 = vmatmul.bf16.gmra.mxu0 %v667
        %v909 = vpop.f32.mrf.mxu0
        %v910 = vadd.f32 %v821, %v909
        %v911 = vpop.f32.mrf.mxu0
        %v912 = vadd.f32 %v823, %v911
        %913 = vmatmul.bf16.gmra.mxu0 %v670
        %v914 = vpop.f32.mrf.mxu0
        %v915 = vadd.f32 %v826, %v914
        %v916 = vpop.f32.mrf.mxu0
        %v917 = vadd.f32 %v828, %v916
        %918 = vmatmul.bf16.gmra.mxu0 %v673
        %v919 = vpop.f32.mrf.mxu0
        %v920 = vadd.f32 %v831, %v919
        %v921 = vpop.f32.mrf.mxu0
        %v922 = vadd.f32 %v833, %v921
        %923 = vmatmul.bf16.gmra.mxu0 %v676
        %v924 = vpop.f32.mrf.mxu0
        %v925 = vadd.f32 %v836, %v924
        %v926 = vpop.f32.mrf.mxu0
        %v927 = vadd.f32 %v838, %v926
        %928 = vmatmul.bf16.gmra.mxu0 %v679
        %v929 = vpop.f32.mrf.mxu0
        %v930 = vadd.f32 %v841, %v929
        %v931 = vpop.f32.mrf.mxu0
        %v932 = vadd.f32 %v843, %v931
        %933 = vmatmul.bf16.gmra.mxu0 %v682
        %v934 = vpop.f32.mrf.mxu0
        %v935 = vadd.f32 %v846, %v934
        %v936 = vpop.f32.mrf.mxu0
        %v937 = vadd.f32 %v848, %v936
        %938 = vmatmul.bf16.gmra.mxu0 %v685
        %v939 = vpop.f32.mrf.mxu0
        %v940 = vadd.f32 %v851, %v939
        %v941 = vpop.f32.mrf.mxu0
        %v942 = vadd.f32 %v853, %v941
        %943 = vmatmul.bf16.gmra.mxu0 %v688
        %v944 = vpop.f32.mrf.mxu0
        %v945 = vadd.f32 %v856, %v944
        %v946 = vpop.f32.mrf.mxu0
        %v947 = vadd.f32 %v858, %v946
        %948 = vmatmul.bf16.gmra.mxu0 %v691
        %v949 = vpop.f32.mrf.mxu0
        %v950 = vadd.f32 %v861, %v949
        %v951 = vpop.f32.mrf.mxu0
        %v952 = vadd.f32 %v863, %v951
        %953 = vmatmul.bf16.gmra.mxu0 %v694
        %v954 = vpop.f32.mrf.mxu0
        %v955 = vadd.f32 %v866, %v954
        %v956 = vpop.f32.mrf.mxu0
        %v957 = vadd.f32 %v868, %v956
        %958 = vmatmul.bf16.gmra.mxu0 %v697
        %v959 = vpop.f32.mrf.mxu0
        %v960 = vadd.f32 %v871, %v959
        %v961 = vpop.f32.mrf.mxu0
        %v962 = vadd.f32 %v873, %v961
        %963 = vmatmul.bf16.gmra.mxu0 %v700
        %v964 = vpop.f32.mrf.mxu0
        %v965 = vadd.f32 %v876, %v964
        %v966 = vpop.f32.mrf.mxu0
        %v967 = vadd.f32 %v878, %v966
        %968 = vdwg.mxu0
        %v969 = vmax.f32 %v890, 0.0
        %v970 = vmax.f32 %v892, 0.0
        %v971 = vmax.f32 %v895, 0.0
        %v972 = vmax.f32 %v897, 0.0
        %v973 = vmax.f32 %v900, 0.0
        %v974 = vmax.f32 %v902, 0.0
        %v975 = vmax.f32 %v905, 0.0
        %v976 = vmax.f32 %v907, 0.0
        %v977 = vmax.f32 %v910, 0.0
        %v978 = vmax.f32 %v912, 0.0
        %v979 = vmax.f32 %v915, 0.0
        %v980 = vmax.f32 %v917, 0.0
        %v981 = vmax.f32 %v920, 0.0
        %v982 = vmax.f32 %v922, 0.0
        %v983 = vmax.f32 %v925, 0.0
        %v984 = vmax.f32 %v927, 0.0
        %v985 = vmax.f32 %v930, 0.0
        %v986 = vmax.f32 %v932, 0.0
        %v987 = vmax.f32 %v935, 0.0
        %v988 = vmax.f32 %v937, 0.0
        %v989 = vmax.f32 %v940, 0.0
        %v990 = vmax.f32 %v942, 0.0
        %v991 = vmax.f32 %v945, 0.0
        %v992 = vmax.f32 %v947, 0.0
        %v993 = vmax.f32 %v950, 0.0
        %v994 = vmax.f32 %v952, 0.0
        %v995 = vmax.f32 %v955, 0.0
        %v996 = vmax.f32 %v957, 0.0
        %v997 = vmax.f32 %v960, 0.0
        %v998 = vmax.f32 %v962, 0.0
        %v999 = vmax.f32 %v965, 0.0
        %v1000 = vmax.f32 %v967, 0.0
        %vm1001 = vcmask 523264
        %1002 = vst.msk [vmem:[%s177] sm:$0xff] %vm1001, %v969
        %1003 = vst.msk [vmem:[%s177 + $0x8] sm:$0xff] %vm1001, %v970
        %1004 = vst.msk [vmem:[%s177 + $0x10] sm:$0xff] %vm1001, %v971
        %1005 = vst.msk [vmem:[%s177 + $0x18] sm:$0xff] %vm1001, %v972
        %1006 = vst.msk [vmem:[%s177 + $0x20] sm:$0xff] %vm1001, %v973
        %1007 = vst.msk [vmem:[%s177 + $0x28] sm:$0xff] %vm1001, %v974
        %1008 = vst.msk [vmem:[%s177 + $0x30] sm:$0xff] %vm1001, %v975
        %1009 = vst.msk [vmem:[%s177 + $0x38] sm:$0xff] %vm1001, %v976
        %1010 = vst.msk [vmem:[%s177 + $0x40] sm:$0xff] %vm1001, %v977
        %1011 = vst.msk [vmem:[%s177 + $0x48] sm:$0xff] %vm1001, %v978
        %1012 = vst.msk [vmem:[%s177 + $0x50] sm:$0xff] %vm1001, %v979
        %1013 = vst.msk [vmem:[%s177 + $0x58] sm:$0xff] %vm1001, %v980
        %1014 = vst.msk [vmem:[%s177 + $0x60] sm:$0xff] %vm1001, %v981
        %1015 = vst.msk [vmem:[%s177 + $0x68] sm:$0xff] %vm1001, %v982
        %1016 = vst.msk [vmem:[%s177 + $0x70] sm:$0xff] %vm1001, %v983
        %1017 = vst.msk [vmem:[%s177 + $0x78] sm:$0xff] %vm1001, %v984
        %1018 = vst.msk [vmem:[%s177 + $0x80] sm:$0xff] %vm1001, %v985
        %1019 = vst.msk [vmem:[%s177 + $0x88] sm:$0xff] %vm1001, %v986
        %1020 = vst.msk [vmem:[%s177 + $0x90] sm:$0xff] %vm1001, %v987
        %1021 = vst.msk [vmem:[%s177 + $0x98] sm:$0xff] %vm1001, %v988
        %1022 = vst.msk [vmem:[%s177 + $0xa0] sm:$0xff] %vm1001, %v989
        %1023 = vst.msk [vmem:[%s177 + $0xa8] sm:$0xff] %vm1001, %v990
        %1024 = vst.msk [vmem:[%s177 + $0xb0] sm:$0xff] %vm1001, %v991
        %1025 = vst.msk [vmem:[%s177 + $0xb8] sm:$0xff] %vm1001, %v992
        %1026 = vst.msk [vmem:[%s177 + $0xc0] sm:$0xff] %vm1001, %v993
        %1027 = vst.msk [vmem:[%s177 + $0xc8] sm:$0xff] %vm1001, %v994
        %1028 = vst.msk [vmem:[%s177 + $0xd0] sm:$0xff] %vm1001, %v995
        %1029 = vst.msk [vmem:[%s177 + $0xd8] sm:$0xff] %vm1001, %v996
        %1030 = vst.msk [vmem:[%s177 + $0xe0] sm:$0xff] %vm1001, %v997
        %1031 = vst.msk [vmem:[%s177 + $0xe8] sm:$0xff] %vm1001, %v998
        %1032 = vst.msk [vmem:[%s177 + $0xf0] sm:$0xff] %vm1001, %v999
        %1033 = vst.msk [vmem:[%s177 + $0xf8] sm:$0xff] %vm1001, %v1000
        %s1034 = sand.u32 %s90, 1
        %s1035 = sand.u32 %s90, 1
        %s1036 = smul.addr %s1035, 256
        %s1037 = scalar_lea.vmem [#allocation2], %s1036
        // Predicated region
        $region33: #{_lambda_.1} parent=31 // pred_check
          %p1038 = pneg %p100
        $region34: #{_lambda_.1} parent=31 // pred_check_branch
          %1040 = sbr.rel (%p1038) target = $region36
        $region35: #{_lambda_.1} parent=31 // pred_region
          %s1041 = smul.u32 32, %s14
          %s1042 = ssub.s32 38, %s1041
          %p1043 = scmp.lt.s32.totalorder %s1042, 32
          %s1044 = scalar_select %p1043, %s1042, 32
          %s1045 = smul.u32 8, %s1044
          %p1046 = scmp.ne.s32.totalorder 0, %s1045
          %s1047 = smul.addr %s1041, 8
          %s1048 = scalar_lea.vmem %s3, %s1047
          // Predicated region
          $region37: #{_lambda_.1} parent=35 // pred_check
            %p1049 = pneg %p1046
          $region38: #{_lambda_.1} parent=35 // pred_check_branch
            %1051 = sbr.rel (%p1049) target = $region40
          $region39: #{_lambda_.1} parent=35 // pred_region
            // Predicated region
            $region41: #{_lambda_.1} parent=39 // pred_check
              _
            $region42: #{_lambda_.1} parent=39 // pred_check_branch
              %1053 = sbr.rel (0) target = $region44
            $region43: #{_lambda_.1} parent=39 // pred_region
              // Predicated region
              $region63: #{_lambda_.1} parent=43 // pred_check
                _
              $region64: #{_lambda_.1} parent=43 // pred_check_branch
                %1165 = sbr.rel (0) target = $region66
              $region65: #{_lambda_.1} parent=43 // pred_region
                %s1166 = sshrl.u32 %s1044, 5
                // While loop
                $region67: #{_lambda_.1} parent=65 // loop_pre_header
                  _
                $region68: #{_lambda_.1} parent=65 // loop_header
                  %s1168 = sphi 0, %s1170
                  %p1169 = scmp.ge.s32.totalorder %s1168, %s1166
                  %s1173 = sphi 0, %s1242
                  %s1174 = sphi %s1037, %s1245
                  %s1175 = sphi %s1048, %s1246
                $region69: #{_lambda_.1} parent=65 // loop_header_branch
                  %1172 = sbr.rel (%p1169) target = $region73
                $region70: #{_lambda_.1} parent=65 // loop_body
                  %v1176 = vld [vmem:[%s1174] sm:$0xff]
                  %1177 = vst [vmem:[%s1175] sm:$0xff] %v1176
                  %v1178 = vld [vmem:[%s1174 + $0x8] sm:$0xff]
                  %1179 = vst [vmem:[%s1175 + $0x8] sm:$0xff] %v1178
                  %v1180 = vld [vmem:[%s1174 + $0x10] sm:$0xff]
                  %1181 = vst [vmem:[%s1175 + $0x10] sm:$0xff] %v1180
                  %v1182 = vld [vmem:[%s1174 + $0x18] sm:$0xff]
                  %1183 = vst [vmem:[%s1175 + $0x18] sm:$0xff] %v1182
                  %v1184 = vld [vmem:[%s1174 + $0x20] sm:$0xff]
                  %1185 = vst [vmem:[%s1175 + $0x20] sm:$0xff] %v1184
                  %v1186 = vld [vmem:[%s1174 + $0x28] sm:$0xff]
                  %1187 = vst [vmem:[%s1175 + $0x28] sm:$0xff] %v1186
                  %v1188 = vld [vmem:[%s1174 + $0x30] sm:$0xff]
                  %1189 = vst [vmem:[%s1175 + $0x30] sm:$0xff] %v1188
                  %v1190 = vld [vmem:[%s1174 + $0x38] sm:$0xff]
                  %1191 = vst [vmem:[%s1175 + $0x38] sm:$0xff] %v1190
                  %v1192 = vld [vmem:[%s1174 + $0x40] sm:$0xff]
                  %1193 = vst [vmem:[%s1175 + $0x40] sm:$0xff] %v1192
                  %v1194 = vld [vmem:[%s1174 + $0x48] sm:$0xff]
                  %1195 = vst [vmem:[%s1175 + $0x48] sm:$0xff] %v1194
                  %v1196 = vld [vmem:[%s1174 + $0x50] sm:$0xff]
                  %1197 = vst [vmem:[%s1175 + $0x50] sm:$0xff] %v1196
                  %v1198 = vld [vmem:[%s1174 + $0x58] sm:$0xff]
                  %1199 = vst [vmem:[%s1175 + $0x58] sm:$0xff] %v1198
                  %v1200 = vld [vmem:[%s1174 + $0x60] sm:$0xff]
                  %1201 = vst [vmem:[%s1175 + $0x60] sm:$0xff] %v1200
                  %v1202 = vld [vmem:[%s1174 + $0x68] sm:$0xff]
                  %1203 = vst [vmem:[%s1175 + $0x68] sm:$0xff] %v1202
                  %v1204 = vld [vmem:[%s1174 + $0x70] sm:$0xff]
                  %1205 = vst [vmem:[%s1175 + $0x70] sm:$0xff] %v1204
                  %v1206 = vld [vmem:[%s1174 + $0x78] sm:$0xff]
                  %1207 = vst [vmem:[%s1175 + $0x78] sm:$0xff] %v1206
                  %v1208 = vld [vmem:[%s1174 + $0x80] sm:$0xff]
                  %1209 = vst [vmem:[%s1175 + $0x80] sm:$0xff] %v1208
                  %v1210 = vld [vmem:[%s1174 + $0x88] sm:$0xff]
                  %1211 = vst [vmem:[%s1175 + $0x88] sm:$0xff] %v1210
                  %v1212 = vld [vmem:[%s1174 + $0x90] sm:$0xff]
                  %1213 = vst [vmem:[%s1175 + $0x90] sm:$0xff] %v1212
                  %v1214 = vld [vmem:[%s1174 + $0x98] sm:$0xff]
                  %1215 = vst [vmem:[%s1175 + $0x98] sm:$0xff] %v1214
                  %v1216 = vld [vmem:[%s1174 + $0xa0] sm:$0xff]
                  %1217 = vst [vmem:[%s1175 + $0xa0] sm:$0xff] %v1216
                  %v1218 = vld [vmem:[%s1174 + $0xa8] sm:$0xff]
                  %1219 = vst [vmem:[%s1175 + $0xa8] sm:$0xff] %v1218
                  %v1220 = vld [vmem:[%s1174 + $0xb0] sm:$0xff]
                  %1221 = vst [vmem:[%s1175 + $0xb0] sm:$0xff] %v1220
                  %v1222 = vld [vmem:[%s1174 + $0xb8] sm:$0xff]
                  %1223 = vst [vmem:[%s1175 + $0xb8] sm:$0xff] %v1222
                  %v1224 = vld [vmem:[%s1174 + $0xc0] sm:$0xff]
                  %1225 = vst [vmem:[%s1175 + $0xc0] sm:$0xff] %v1224
                  %v1226 = vld [vmem:[%s1174 + $0xc8] sm:$0xff]
                  %1227 = vst [vmem:[%s1175 + $0xc8] sm:$0xff] %v1226
                  %v1228 = vld [vmem:[%s1174 + $0xd0] sm:$0xff]
                  %1229 = vst [vmem:[%s1175 + $0xd0] sm:$0xff] %v1228
                  %v1230 = vld [vmem:[%s1174 + $0xd8] sm:$0xff]
                  %1231 = vst [vmem:[%s1175 + $0xd8] sm:$0xff] %v1230
                  %v1232 = vld [vmem:[%s1174 + $0xe0] sm:$0xff]
                  %1233 = vst [vmem:[%s1175 + $0xe0] sm:$0xff] %v1232
                  %v1234 = vld [vmem:[%s1174 + $0xe8] sm:$0xff]
                  %1235 = vst [vmem:[%s1175 + $0xe8] sm:$0xff] %v1234
                  %v1236 = vld [vmem:[%s1174 + $0xf0] sm:$0xff]
                  %1237 = vst [vmem:[%s1175 + $0xf0] sm:$0xff] %v1236
                  %v1238 = vld [vmem:[%s1174 + $0xf8] sm:$0xff]
                  %1239 = vst [vmem:[%s1175 + $0xf8] sm:$0xff] %v1238
                  %s1240 = sadd.s32 1, %s1173
                  %p1241 = scmp.ge.s32.totalorder %s1240, %s1166
                  %s1242 = scalar_select %p1241, 0, %s1240
                  %s1243 = smul.u32 %s1242, 256
                  %s1244 = smul.u32 %s1242, 256
                  %s1245 = scalar_lea.vmem %s1037, %s1243 [#allocation2]
                  %s1246 = scalar_lea.vmem %s1048, %s1244
                $region71: #{_lambda_.1} parent=65 // loop_footer
                  %s1170 = sadd.s32 %s1168, 1
                $region72: #{_lambda_.1} parent=65 // loop_footer_branch
                  %1167 = sbr.rel target = $region68
                $region73: #{_lambda_.1} parent=65 // loop_exit
                  _
                %s1247 = sshrl.u32 %s1044, 5
                %s1248 = sand.u32 %s1044, 31
                %s1249 = smul.u32 %s1247, 32
                %s1250 = smul.u32 8, %s1249
                %s1251 = scalar_lea.vmem %s1037, %s1250 [#allocation2]
                %s1252 = smul.u32 8, %s1249
                %s1253 = scalar_lea.vmem %s1048, %s1252
                // While loop
                $region74: #{_lambda_.1} parent=65 // loop_pre_header
                  _
                $region75: #{_lambda_.1} parent=65 // loop_header
                  %s1255 = sphi 0, %s1257
                  %p1256 = scmp.ge.s32.totalorder %s1255, %s1248
                  %s1260 = sphi 0, %s1267
                  %s1261 = sphi %s1251, %s1270
                  %s1262 = sphi %s1253, %s1271
                $region76: #{_lambda_.1} parent=65 // loop_header_branch
                  %1259 = sbr.rel (%p1256) target = $region80
                $region77: #{_lambda_.1} parent=65 // loop_body
                  %v1263 = vld [vmem:[%s1261] sm:$0xff]
                  %1264 = vst [vmem:[%s1262] sm:$0xff] %v1263
                  %s1265 = sadd.s32 1, %s1260
                  %p1266 = scmp.ge.s32.totalorder %s1265, %s1248
                  %s1267 = scalar_select %p1266, 0, %s1265
                  %s1268 = smul.u32 %s1267, 8
                  %s1269 = smul.u32 %s1267, 8
                  %s1270 = scalar_lea.vmem %s1251, %s1268 [#allocation2]
                  %s1271 = scalar_lea.vmem %s1253, %s1269
                $region78: #{_lambda_.1} parent=65 // loop_footer
                  %s1257 = sadd.s32 %s1255, 1
                $region79: #{_lambda_.1} parent=65 // loop_footer_branch
                  %1254 = sbr.rel target = $region75
                $region80: #{_lambda_.1} parent=65 // loop_exit
                  _
              $region66: #{_lambda_.1} parent=43 // pred_fallthru
                _
              // Predicated region
              $region81: #{_lambda_.1} parent=43 // pred_check
                _
              $region82: #{_lambda_.1} parent=43 // pred_check_branch
                %1273 = sbr.rel target = $region84
              $region83: #{_lambda_.1} parent=43 // pred_region
                _
              $region84: #{_lambda_.1} parent=43 // pred_fallthru
                _
            $region44: #{_lambda_.1} parent=39 // pred_fallthru
              _
            // Predicated region
            $region45: #{_lambda_.1} parent=39 // pred_check
              _
            $region46: #{_lambda_.1} parent=39 // pred_check_branch
              %1055 = sbr.rel target = $region48
            $region47: #{_lambda_.1} parent=39 // pred_region
              %s1057 = ssub.s32 256, 1
              %s1058 = sshrl.u32 %s1044, 5
              // While loop
              $region49: #{_lambda_.1} parent=47 // loop_pre_header
                _
              $region50: #{_lambda_.1} parent=47 // loop_header
                %s1060 = sphi 0, %s1062
                %p1061 = scmp.ge.s32.totalorder %s1060, %s1058
                %s1065 = sphi 0, %s1134
                %s1066 = sphi %s1037, %s1137
                %s1067 = sphi %s1048, %s1138
              $region51: #{_lambda_.1} parent=47 // loop_header_branch
                %1064 = sbr.rel (%p1061) target = $region55
              $region52: #{_lambda_.1} parent=47 // loop_body
                %v1068 = vld [vmem:[%s1066] sm:%s1057]
                %1069 = vst [vmem:[%s1067] sm:%s1057] %v1068
                %v1070 = vld [vmem:[%s1066 + $0x8] sm:%s1057]
                %1071 = vst [vmem:[%s1067 + $0x8] sm:%s1057] %v1070
                %v1072 = vld [vmem:[%s1066 + $0x10] sm:%s1057]
                %1073 = vst [vmem:[%s1067 + $0x10] sm:%s1057] %v1072
                %v1074 = vld [vmem:[%s1066 + $0x18] sm:%s1057]
                %1075 = vst [vmem:[%s1067 + $0x18] sm:%s1057] %v1074
                %v1076 = vld [vmem:[%s1066 + $0x20] sm:%s1057]
                %1077 = vst [vmem:[%s1067 + $0x20] sm:%s1057] %v1076
                %v1078 = vld [vmem:[%s1066 + $0x28] sm:%s1057]
                %1079 = vst [vmem:[%s1067 + $0x28] sm:%s1057] %v1078
                %v1080 = vld [vmem:[%s1066 + $0x30] sm:%s1057]
                %1081 = vst [vmem:[%s1067 + $0x30] sm:%s1057] %v1080
                %v1082 = vld [vmem:[%s1066 + $0x38] sm:%s1057]
                %1083 = vst [vmem:[%s1067 + $0x38] sm:%s1057] %v1082
                %v1084 = vld [vmem:[%s1066 + $0x40] sm:%s1057]
                %1085 = vst [vmem:[%s1067 + $0x40] sm:%s1057] %v1084
                %v1086 = vld [vmem:[%s1066 + $0x48] sm:%s1057]
                %1087 = vst [vmem:[%s1067 + $0x48] sm:%s1057] %v1086
                %v1088 = vld [vmem:[%s1066 + $0x50] sm:%s1057]
                %1089 = vst [vmem:[%s1067 + $0x50] sm:%s1057] %v1088
                %v1090 = vld [vmem:[%s1066 + $0x58] sm:%s1057]
                %1091 = vst [vmem:[%s1067 + $0x58] sm:%s1057] %v1090
                %v1092 = vld [vmem:[%s1066 + $0x60] sm:%s1057]
                %1093 = vst [vmem:[%s1067 + $0x60] sm:%s1057] %v1092
                %v1094 = vld [vmem:[%s1066 + $0x68] sm:%s1057]
                %1095 = vst [vmem:[%s1067 + $0x68] sm:%s1057] %v1094
                %v1096 = vld [vmem:[%s1066 + $0x70] sm:%s1057]
                %1097 = vst [vmem:[%s1067 + $0x70] sm:%s1057] %v1096
                %v1098 = vld [vmem:[%s1066 + $0x78] sm:%s1057]
                %1099 = vst [vmem:[%s1067 + $0x78] sm:%s1057] %v1098
                %v1100 = vld [vmem:[%s1066 + $0x80] sm:%s1057]
                %1101 = vst [vmem:[%s1067 + $0x80] sm:%s1057] %v1100
                %v1102 = vld [vmem:[%s1066 + $0x88] sm:%s1057]
                %1103 = vst [vmem:[%s1067 + $0x88] sm:%s1057] %v1102
                %v1104 = vld [vmem:[%s1066 + $0x90] sm:%s1057]
                %1105 = vst [vmem:[%s1067 + $0x90] sm:%s1057] %v1104
                %v1106 = vld [vmem:[%s1066 + $0x98] sm:%s1057]
                %1107 = vst [vmem:[%s1067 + $0x98] sm:%s1057] %v1106
                %v1108 = vld [vmem:[%s1066 + $0xa0] sm:%s1057]
                %1109 = vst [vmem:[%s1067 + $0xa0] sm:%s1057] %v1108
                %v1110 = vld [vmem:[%s1066 + $0xa8] sm:%s1057]
                %1111 = vst [vmem:[%s1067 + $0xa8] sm:%s1057] %v1110
                %v1112 = vld [vmem:[%s1066 + $0xb0] sm:%s1057]
                %1113 = vst [vmem:[%s1067 + $0xb0] sm:%s1057] %v1112
                %v1114 = vld [vmem:[%s1066 + $0xb8] sm:%s1057]
                %1115 = vst [vmem:[%s1067 + $0xb8] sm:%s1057] %v1114
                %v1116 = vld [vmem:[%s1066 + $0xc0] sm:%s1057]
                %1117 = vst [vmem:[%s1067 + $0xc0] sm:%s1057] %v1116
                %v1118 = vld [vmem:[%s1066 + $0xc8] sm:%s1057]
                %1119 = vst [vmem:[%s1067 + $0xc8] sm:%s1057] %v1118
                %v1120 = vld [vmem:[%s1066 + $0xd0] sm:%s1057]
                %1121 = vst [vmem:[%s1067 + $0xd0] sm:%s1057] %v1120
                %v1122 = vld [vmem:[%s1066 + $0xd8] sm:%s1057]
                %1123 = vst [vmem:[%s1067 + $0xd8] sm:%s1057] %v1122
                %v1124 = vld [vmem:[%s1066 + $0xe0] sm:%s1057]
                %1125 = vst [vmem:[%s1067 + $0xe0] sm:%s1057] %v1124
                %v1126 = vld [vmem:[%s1066 + $0xe8] sm:%s1057]
                %1127 = vst [vmem:[%s1067 + $0xe8] sm:%s1057] %v1126
                %v1128 = vld [vmem:[%s1066 + $0xf0] sm:%s1057]
                %1129 = vst [vmem:[%s1067 + $0xf0] sm:%s1057] %v1128
                %v1130 = vld [vmem:[%s1066 + $0xf8] sm:%s1057]
                %1131 = vst [vmem:[%s1067 + $0xf8] sm:%s1057] %v1130
                %s1132 = sadd.s32 1, %s1065
                %p1133 = scmp.ge.s32.totalorder %s1132, %s1058
                %s1134 = scalar_select %p1133, 0, %s1132
                %s1135 = smul.u32 %s1134, 256
                %s1136 = smul.u32 %s1134, 256
                %s1137 = scalar_lea.vmem %s1037, %s1135 [#allocation2]
                %s1138 = scalar_lea.vmem %s1048, %s1136
              $region53: #{_lambda_.1} parent=47 // loop_footer
                %s1062 = sadd.s32 %s1060, 1
              $region54: #{_lambda_.1} parent=47 // loop_footer_branch
                %1059 = sbr.rel target = $region50
              $region55: #{_lambda_.1} parent=47 // loop_exit
                _
              %s1139 = sshrl.u32 %s1044, 5
              %s1140 = sand.u32 %s1044, 31
              %s1141 = smul.u32 %s1139, 32
              %s1142 = smul.u32 8, %s1141
              %s1143 = scalar_lea.vmem %s1037, %s1142 [#allocation2]
              %s1144 = smul.u32 8, %s1141
              %s1145 = scalar_lea.vmem %s1048, %s1144
              // While loop
              $region56: #{_lambda_.1} parent=47 // loop_pre_header
                _
              $region57: #{_lambda_.1} parent=47 // loop_header
                %s1147 = sphi 0, %s1149
                %p1148 = scmp.ge.s32.totalorder %s1147, %s1140
                %s1152 = sphi 0, %s1159
                %s1153 = sphi %s1143, %s1162
                %s1154 = sphi %s1145, %s1163
              $region58: #{_lambda_.1} parent=47 // loop_header_branch
                %1151 = sbr.rel (%p1148) target = $region62
              $region59: #{_lambda_.1} parent=47 // loop_body
                %v1155 = vld [vmem:[%s1153] sm:%s1057]
                %1156 = vst [vmem:[%s1154] sm:%s1057] %v1155
                %s1157 = sadd.s32 1, %s1152
                %p1158 = scmp.ge.s32.totalorder %s1157, %s1140
                %s1159 = scalar_select %p1158, 0, %s1157
                %s1160 = smul.u32 %s1159, 8
                %s1161 = smul.u32 %s1159, 8
                %s1162 = scalar_lea.vmem %s1143, %s1160 [#allocation2]
                %s1163 = scalar_lea.vmem %s1145, %s1161
              $region60: #{_lambda_.1} parent=47 // loop_footer
                %s1149 = sadd.s32 %s1147, 1
              $region61: #{_lambda_.1} parent=47 // loop_footer_branch
                %1146 = sbr.rel target = $region57
              $region62: #{_lambda_.1} parent=47 // loop_exit
                _
            $region48: #{_lambda_.1} parent=39 // pred_fallthru
              _
          $region40: #{_lambda_.1} parent=35 // pred_fallthru
            _
          %1274 = vnop
        $region36: #{_lambda_.1} parent=31 // pred_fallthru
          _
      $region32: #{_lambda_.1} parent=5 // pred_fallthru
        _
      %p1275 = scmp.le.s32.totalorder 2, %s9
      // Predicated region
      $region85: #{_lambda_.1} parent=5 // pred_check
        %p1276 = pneg %p1275
      $region86: #{_lambda_.1} parent=5 // pred_check_branch
        %1278 = sbr.rel (%p1276) target = $region88
      $region87: #{_lambda_.1} parent=5 // pred_region
        %s1279 = ssub.s32 %s9, 2
        // Predicated region
        $region89: #{_lambda_.1} parent=87 // pred_check
          %p1280 = pneg %p106
        $region90: #{_lambda_.1} parent=87 // pred_check_branch
          %1282 = sbr.rel (%p1280) target = $region92
        $region91: #{_lambda_.1} parent=87 // pred_region
          %s1283 = sand.u32 %s91, 1
          %s1284 = sand.u32 %s91, 1
          %s1285 = smul.addr %s1284, 256
          %s1286 = scalar_lea.vmem [#allocation2], %s1285
        $region92: #{_lambda_.1} parent=87 // pred_fallthru
          _
      $region88: #{_lambda_.1} parent=5 // pred_fallthru
        _
    $region6: #{_lambda_.1} parent=1 // loop_footer
      %s13 = sadd.s32 1, %s9
    $region7: #{_lambda_.1} parent=1 // loop_footer_branch
      %8 = sbr.rel target = $region3
    $region8: #{_lambda_.1} parent=1 // loop_exit
      _

</llo_original>
